<compile_context>
chip_gen: v7x
topology: tpu7x:2x2x1
jax: 0.10.0
libtpu: 0.0.40
codegen_flags: <defaults>
</compile_context>

<pallas_src>
import functools

import numpy as np

import jax
import jax.numpy as jnp
from jax.experimental import pallas as pl
from jax.experimental.pallas import tpu as pltpu

EPS = 1e-5  # nn.LayerNorm default


def _round_up(a, b):
    return (a + b - 1) // b * b


def _silu(z):
    # SiLU(z) = z * sigmoid(z) = 0.5 * z * (1 + tanh(z/2)): one EUP op per element.
    return 0.5 * z * (1.0 + jnp.tanh(0.5 * z))


def _force_gated_output_kernel(
    x_ref,        # (tm, H)        rows, DMA dtype (native or bf16)
    wu_ref,       # (H, 3H) fused  or (3, H, H) chunked up-proj weight (matmul dtype)
    g_up_ref,     # (3, H)         up LayerNorm gamma, per chunk (f32)
    b_up_ref,     # (3, H)         up LayerNorm beta, per chunk (f32)
    wg_ref,       # (H, 128) MXU-padded gate weight (gamma folded)  or (3, H) f32
    gate_c_ref,   # (2, 3)         row0 = wg @ g_gate, row1 = wg @ b_gate (f32)
    gwv_ref,      # (1, H)         g_vec * wv (f32)
    vec_c_ref,    # (1, 2)         [sum(g_vec*wv), sum(b_vec*wv)] (f32)
    out_ref,      # (tm, 3)
    *,
    H: int,
    fused_up: bool,
    gate_mxu: bool,
    mm_dtype,
):
    x = x_ref[...].astype(jnp.float32)

    # ---- gate path: SiLU -> LayerNorm(H) -> Linear(H,3), affine+Linear folded ----
    #   gate_j = rstd*( <h, g*wg_j> - mu*<g, wg_j> ) + <b, wg_j>
    h = _silu(x)
    mu_g = jnp.mean(h, axis=-1, keepdims=True)
    msq_g = jnp.mean(h * h, axis=-1, keepdims=True)
    rstd_g = jax.lax.rsqrt(jnp.maximum(msq_g - mu_g * mu_g, 0.0) + EPS)
    if gate_mxu:
        # Gate dots on the MXU (weights padded to 128 output lanes; cols 0..2 useful).
        gd = jnp.dot(h.astype(mm_dtype), wg_ref[...],
                     preferred_element_type=jnp.float32)          # (tm, 128)

    # ---- up path: Linear(H,3H) -> SiLU -> LayerNorm(3H) ----
    # Variance via E[s^2] - mu^2 accumulated per chunk (no d[] temporaries).
    x_mm = x.astype(mm_dtype)
    if fused_up:
        u = jnp.dot(x_mm, wu_ref[...], preferred_element_type=jnp.float32)   # (tm, 3H)
        s = [_silu(u[:, j * H:(j + 1) * H]) for j in range(3)]   # lane-aligned (H%128==0)
    else:
        s = [_silu(jnp.dot(x_mm, wu_ref[j], preferred_element_type=jnp.float32))
             for j in range(3)]
    tot = (jnp.sum(s[0], axis=-1, keepdims=True)
           + jnp.sum(s[1], axis=-1, keepdims=True)
           + jnp.sum(s[2], axis=-1, keepdims=True))
    totsq = (jnp.sum(s[0] * s[0], axis=-1, keepdims=True)
             + jnp.sum(s[1] * s[1], axis=-1, keepdims=True)
             + jnp.sum(s[2] * s[2], axis=-1, keepdims=True))
    inv3h = 1.0 / (3.0 * H)
    mu_u = tot * inv3h
    rstd_u = jax.lax.rsqrt(jnp.maximum(totsq * inv3h - mu_u * mu_u, 0.0) + EPS)

    # ---- per chunk: LN(3H) affine -> SiLU -> LayerNorm(H) -> Linear(H,1), folded ----
    sgw = vec_c_ref[0:1, 0:1]                                     # sum(g_vec * wv)
    sbw = vec_c_ref[0:1, 1:2]                                     # sum(b_vec * wv)
    for j in range(3):                                            # static unroll
        if gate_mxu:
            dj = gd[:, j:j + 1]
        else:
            dj = jnp.sum(h * wg_ref[j:j + 1, :], axis=-1, keepdims=True)
        gate_j = rstd_g * (dj - mu_g * gate_c_ref[0:1, j:j + 1]) + gate_c_ref[1:2, j:j + 1]

        cj = (s[j] - mu_u) * (rstd_u * g_up_ref[j:j + 1, :]) + b_up_ref[j:j + 1, :]
        t = _silu(cj)
        mu_v = jnp.mean(t, axis=-1, keepdims=True)
        msq_v = jnp.mean(t * t, axis=-1, keepdims=True)
        rstd_v = jax.lax.rsqrt(jnp.maximum(msq_v - mu_v * mu_v, 0.0) + EPS)
        dv = jnp.sum(t * gwv_ref[...], axis=-1, keepdims=True)
        vec_j = rstd_v * (dv - mu_v * sgw) + sbw

        # Output is only 3 lanes wide; a lane-dense (3, Mp) layout would avoid masked
        # stores but output bytes are tiny vs the x DMA, so we keep (Mp, 3).
        out_ref[:, j:j + 1] = (vec_j * gate_j).astype(out_ref.dtype)


def _vmem_limit_bytes():
    cap = 0
    try:
        info = pltpu.get_tpu_info()
        for name in ("vmem_capacity_bytes", "vmem_size_bytes", "vmem_bytes"):
            val = getattr(info, name, None)
            if isinstance(val, int) and val > 0:
                cap = val
                break
    except Exception:
        cap = 0
    if cap <= 0:
        cap = 64 * 1024 * 1024           # conservative default (v7x per-TensorCore)
    return cap * 3 // 4                  # headroom for compiler-internal scratch


def _choose_tm(M, H, x_bytes, w_bytes, vmem_budget):
    """Row-tile size from a VMEM budget (generation-aware via vmem_budget).

    Budget: double-buffered resident weights (up-proj + padded gate weight) +
    double-buffered x tile at its DMA dtype + ~7 live (tm, H) f32 temporaries.
    """
    m8 = _round_up(max(M, 1), 8)
    weight_vmem = (3 * H * H + 128 * H) * w_bytes * 2 + 16 * H * 4
    per_row = 2 * H * x_bytes + 7 * H * 4 + 64
    avail = vmem_budget - weight_vmem - (4 << 20)
    rows = int(avail) // per_row if avail > 0 else 0
    tm = max(8, min(4096, rows) // 8 * 8)          # graceful downward path when tight
    if m8 <= tm:
        # Small problem: cover it with (at most) two tiles so 2-TensorCore chips (v7x)
        # get one grid step per core; the extra step costs ~0.35us on single-core parts.
        if m8 >= 16:
            return _round_up((m8 + 1) // 2, 8)
        return m8
    return tm


def prepare_force_gated_params(params, *, matmul_dtype=jnp.bfloat16, gate_via_mxu=True):
    """Fold affines / transpose / cast ONCE at init time (not per forward call)."""
    mm = np.dtype(matmul_dtype)
    H = params["g_gate"].shape[0]
    wu = jnp.asarray(params["wu"])                       # (3H, H), torch (out, in)
    fused_up = (H % 128 == 0)
    if fused_up:
        wu_k = wu.T.astype(mm)                           # (H, 3H): one fused MXU matmul
    else:
        # (3, H, H) chunks: x @ wu_k[j] == (x @ Wu.T)[:, jH:(j+1)H]; lane-aligned for any H.
        wu_k = wu.reshape(3, H, H).transpose(0, 2, 1).astype(mm)

    wg = jnp.asarray(params["wg"])                       # (3, H)
    g_gate = params["g_gate"]
    wgg = wg * g_gate[None, :]                           # gate LN gamma folded
    if gate_via_mxu:
        wg_k = jnp.zeros((H, 128), jnp.float32).at[:, :3].set(wgg.T).astype(mm)
    else:
        wg_k = wgg.astype(jnp.float32)

    wv = params["wv"][0]                                 # (H,)
    return {
        "wu": wu_k,
        "g_up3": params["g_up"].reshape(3, H).astype(jnp.float32),
        "b_up3": params["b_up"].reshape(3, H).astype(jnp.float32),
        "wg": wg_k,
        "gate_c": jnp.stack([wg @ g_gate, wg @ params["b_gate"]]).astype(jnp.float32),
        "gwv": (params["g_vec"] * wv)[None, :].astype(jnp.float32),
        "vec_c": jnp.stack([jnp.sum(params["g_vec"] * wv),
                            jnp.sum(params["b_vec"] * wv)]).reshape(1, 2).astype(jnp.float32),
        "config": {"H": H, "fused_up": fused_up, "gate_mxu": gate_via_mxu,
                   "matmul_dtype": mm},
    }


def _const_spec(shape):
    nd = len(shape)

    def idx(i, _nd=nd):
        return (0,) * _nd

    return pl.BlockSpec(shape, idx)


def force_gated_output(x, v, prepared, *, tm=None, x_dma_dtype=None):
    """x: (B, N, H); v is unused (matches the PyTorch forward). `prepared` comes from
    prepare_force_gated_params (call it once per model, not per forward)."""
    del v
    B, N, H = x.shape
    cfg = prepared["config"]
    assert H == cfg["H"], f"hidden size mismatch: {H} vs prepared {cfg['H']}"
    M = B * N

    out_dtype = x.dtype
    dma_dtype = np.dtype(x_dma_dtype) if x_dma_dtype is not None else np.dtype(x.dtype)
    x2 = x.reshape(M, H).astype(dma_dtype)               # no forced f32 upcast in HBM

    vmem_limit = _vmem_limit_bytes()
    if tm is None:
        tm = _choose_tm(M, H, dma_dtype.itemsize, cfg["matmul_dtype"].itemsize, vmem_limit)
    tm = max(8, _round_up(int(tm), 8))

    Mp = _round_up(M, tm)
    if Mp != M:
        x2 = jnp.pad(x2, ((0, Mp - M), (0, 0)))          # zero rows are sliced off below

    kernel = functools.partial(
        _force_gated_output_kernel,
        H=H, fused_up=cfg["fused_up"], gate_mxu=cfg["gate_mxu"],
        mm_dtype=cfg["matmul_dtype"],
    )

    out = pl.pallas_call(
        kernel,
        out_shape=jax.ShapeDtypeStruct((Mp, 3), out_dtype),
        grid=(Mp // tm,),
        in_specs=[
            pl.BlockSpec((tm, H), lambda i: (i, 0)),
            _const_spec(prepared["wu"].shape),
            _const_spec((3, H)),
            _const_spec((3, H)),
            _const_spec(prepared["wg"].shape),
            _const_spec((2, 3)),
            _const_spec((1, H)),
            _const_spec((1, 2)),
        ],
        out_specs=pl.BlockSpec((tm, 3), lambda i: (i, 0)),
        compiler_params=pltpu.CompilerParams(
            dimension_semantics=("parallel",),
            vmem_limit_bytes=vmem_limit,
        ),
    )(x2, prepared["wu"], prepared["g_up3"], prepared["b_up3"], prepared["wg"],
      prepared["gate_c"], prepared["gwv"], prepared["vec_c"])

    return out[:M].reshape(B, N, 3)


def init_params(key, H):
    """Deterministic synthetic parameters with the module's __init__ shapes (torch layout)."""
    k1, k2, k3 = jax.random.split(key, 3)
    scale = 1.0 / jnp.sqrt(H)
    return {
        "wu": jax.random.normal(k1, (3 * H, H), jnp.float32) * scale,   # Linear(H, 3H)
        "g_up": jnp.full((3 * H,), 1.1, jnp.float32),
        "b_up": jnp.full((3 * H,), 0.05, jnp.float32),
        "g_gate": jnp.full((H,), 0.9, jnp.float32),
        "b_gate": jnp.full((H,), -0.02, jnp.float32),
        "wg": jax.random.normal(k2, (3, H), jnp.float32) * scale,       # Linear(H, 3)
        "g_vec": jnp.full((H,), 1.05, jnp.float32),
        "b_vec": jnp.full((H,), 0.01, jnp.float32),
        "wv": jax.random.normal(k3, (1, H), jnp.float32) * scale,       # Linear(H, 1)
    }


def reference_forward(x, p):
    """Pure-JAX reference mirroring the PyTorch forward exactly (highest matmul precision)."""
    hp = jax.lax.Precision.HIGHEST

    def silu(z):
        return z * jax.nn.sigmoid(z)

    def ln(z, g, b):
        mu = z.mean(-1, keepdims=True)
        var = ((z - mu) ** 2).mean(-1, keepdims=True)
        return (z - mu) / jnp.sqrt(var + EPS) * g + b

    B, N, H = x.shape
    gate = jnp.einsum("bnh,ch->bnc", ln(silu(x), p["g_gate"], p["b_gate"]),
                      p["wg"], precision=hp)                             # (B,N,3)
    vec = jnp.einsum("bnh,ch->bnc", x, p["wu"], precision=hp)            # (B,N,3H)
    vec = ln(silu(vec), p["g_up"], p["b_up"]).reshape(B, N, 3, H)
    vn = ln(silu(vec), p["g_vec"], p["b_vec"])
    return jnp.einsum("bnch,h->bnc", vn, p["wv"][0], precision=hp) * gate


if __name__ == "__main__":
    B, N, H = 2, 8, 32
    key = jax.random.PRNGKey(0)
    kx, kv, kp = jax.random.split(key, 3)
    x = jax.random.normal(kx, (B, N, H), jnp.float32)
    v = jax.random.normal(kv, (B, N, 3, H), jnp.float32)   # unused by forward
    params = init_params(kp, H)
    ref = reference_forward(x, params)

    # f32-weight configuration: all kernel math in f32 (checks the folded algebra).
    prep_f32 = prepare_force_gated_params(params, matmul_dtype=jnp.float32)
    out = jax.block_until_ready(force_gated_output(x, v, prep_f32))
    assert out.shape == (B, N, 3)
    err = float(jnp.max(jnp.abs(out - ref)))
    assert err < 3e-2, f"f32-path max abs err {err}"

    # Fast configuration: bf16 resident weights + bf16 x DMA (half the HBM bytes).
    prep_bf16 = prepare_force_gated_params(params, matmul_dtype=jnp.bfloat16)
    out_fast = jax.block_until_ready(
        force_gated_output(x, v, prep_bf16, x_dma_dtype=jnp.bfloat16))
    assert out_fast.shape == (B, N, 3)
    err_fast = float(jnp.max(jnp.abs(out_fast - ref)))
    assert err_fast < 2e-1, f"fast-path max abs err {err_fast}"

    print("KERNEL_OK")
</pallas_src>

<mosaic_0001>
module attributes {stable_mosaic.version = 11 : i64} {
  func.func @_force_gated_output_kernel(%arg0: i32, %arg1: memref<8x32xf32, #tpu.memory_space<vmem>>, %arg2: memref<3x32x32xf32, #tpu.memory_space<vmem>>, %arg3: memref<3x32xf32, #tpu.memory_space<vmem>>, %arg4: memref<3x32xf32, #tpu.memory_space<vmem>>, %arg5: memref<32x128xf32, #tpu.memory_space<vmem>>, %arg6: memref<2x3xf32, #tpu.memory_space<vmem>>, %arg7: memref<1x32xf32, #tpu.memory_space<vmem>>, %arg8: memref<1x2xf32, #tpu.memory_space<vmem>>, %arg9: memref<8x3xf32, #tpu.memory_space<vmem>>) attributes {dimension_semantics = [#tpu.dimension_semantics<parallel>], iteration_bounds = array<i64: 2>, scalar_prefetch = 0 : i64, scratch_operands = 0 : i64, tpu.core_type = #tpu.core_type<tc>, window_params = [{transform_indices = @transform_0, window_bounds = array<i64: 8, 32>}, {pipeline_mode = #tpu.pipeline_mode<synchronous>, transform_indices = @transform_1, window_bounds = array<i64: 3, 32, 32>}, {pipeline_mode = #tpu.pipeline_mode<synchronous>, transform_indices = @transform_2, window_bounds = array<i64: 3, 32>}, {pipeline_mode = #tpu.pipeline_mode<synchronous>, transform_indices = @transform_3, window_bounds = array<i64: 3, 32>}, {pipeline_mode = #tpu.pipeline_mode<synchronous>, transform_indices = @transform_4, window_bounds = array<i64: 32, 128>}, {pipeline_mode = #tpu.pipeline_mode<synchronous>, transform_indices = @transform_5, window_bounds = array<i64: 2, 3>}, {pipeline_mode = #tpu.pipeline_mode<synchronous>, transform_indices = @transform_6, window_bounds = array<i64: 1, 32>}, {pipeline_mode = #tpu.pipeline_mode<synchronous>, transform_indices = @transform_7, window_bounds = array<i64: 1, 2>}, {transform_indices = @transform_8, window_bounds = array<i64: 8, 3>}]} {
    %c0 = arith.constant 0 : index
    %c0_0 = arith.constant 0 : index
    %0 = vector.load %arg1[%c0, %c0_0] : memref<8x32xf32, #tpu.memory_space<vmem>>, vector<8x32xf32>
    %cst = arith.constant 5.000000e-01 : f32
    %1 = vector.broadcast %cst : f32 to vector<8x32xf32>
    %2 = arith.mulf %1, %0 : vector<8x32xf32>
    %cst_1 = arith.constant 5.000000e-01 : f32
    %3 = vector.broadcast %cst_1 : f32 to vector<8x32xf32>
    %4 = arith.mulf %3, %0 : vector<8x32xf32>
    %5 = math.tanh %4 : vector<8x32xf32>
    %cst_2 = arith.constant 1.000000e+00 : f32
    %6 = vector.broadcast %cst_2 : f32 to vector<8x32xf32>
    %7 = arith.addf %6, %5 : vector<8x32xf32>
    %8 = arith.mulf %2, %7 : vector<8x32xf32>
    %cst_3 = arith.constant dense<0.000000e+00> : vector<8xf32>
    %9 = vector.multi_reduction <add>, %8, %cst_3 [1] : vector<8x32xf32> to vector<8xf32>
    %10 = vector.shape_cast %9 : vector<8xf32> to vector<8x1xf32>
    %cst_4 = arith.constant 3.200000e+01 : f32
    %11 = vector.broadcast %cst_4 : f32 to vector<8x1xf32>
    %12 = arith.divf %10, %11 : vector<8x1xf32>
    %13 = arith.mulf %8, %8 : vector<8x32xf32>
    %cst_5 = arith.constant dense<0.000000e+00> : vector<8xf32>
    %14 = vector.multi_reduction <add>, %13, %cst_5 [1] : vector<8x32xf32> to vector<8xf32>
    %15 = vector.shape_cast %14 : vector<8xf32> to vector<8x1xf32>
    %cst_6 = arith.constant 3.200000e+01 : f32
    %16 = vector.broadcast %cst_6 : f32 to vector<8x1xf32>
    %17 = arith.divf %15, %16 : vector<8x1xf32>
    %18 = arith.mulf %12, %12 : vector<8x1xf32>
    %19 = arith.subf %17, %18 : vector<8x1xf32>
    %cst_7 = arith.constant 0.000000e+00 : f32
    %20 = vector.broadcast %cst_7 : f32 to vector<8x1xf32>
    %21 = arith.maximumf %19, %20 : vector<8x1xf32>
    %cst_8 = arith.constant 9.99999974E-6 : f32
    %22 = vector.broadcast %cst_8 : f32 to vector<8x1xf32>
    %23 = arith.addf %21, %22 : vector<8x1xf32>
    %24 = math.rsqrt %23 : vector<8x1xf32>
    %c0_9 = arith.constant 0 : index
    %c0_10 = arith.constant 0 : index
    %25 = vector.load %arg5[%c0_9, %c0_10] : memref<32x128xf32, #tpu.memory_space<vmem>>, vector<32x128xf32>
    %cst_11 = arith.constant dense<0.000000e+00> : vector<8x128xf32>
    %26 = tpu.matmul %8, %25, %cst_11 {dimension_numbers = #tpu.dot_dimension_numbers<[1], [0], [0], [1], [0, 0, 1, 1], [], []>} : vector<8x32xf32>, vector<32x128xf32>, vector<8x128xf32> -> vector<8x128xf32>
    %c0_12 = arith.constant 0 : index
    %c0_13 = arith.constant 0 : index
    %c0_14 = arith.constant 0 : index
    %27 = vector.load %arg2[%c0_12, %c0_13, %c0_14] : memref<3x32x32xf32, #tpu.memory_space<vmem>>, vector<1x32x32xf32>
    %28 = vector.shape_cast %27 : vector<1x32x32xf32> to vector<32x32xf32>
    %cst_15 = arith.constant dense<0.000000e+00> : vector<8x32xf32>
    %29 = tpu.matmul %0, %28, %cst_15 {dimension_numbers = #tpu.dot_dimension_numbers<[1], [0], [0], [1], [0, 0, 1, 1], [], []>} : vector<8x32xf32>, vector<32x32xf32>, vector<8x32xf32> -> vector<8x32xf32>
    %cst_16 = arith.constant 5.000000e-01 : f32
    %30 = vector.broadcast %cst_16 : f32 to vector<8x32xf32>
    %31 = arith.mulf %30, %29 : vector<8x32xf32>
    %cst_17 = arith.constant 5.000000e-01 : f32
    %32 = vector.broadcast %cst_17 : f32 to vector<8x32xf32>
    %33 = arith.mulf %32, %29 : vector<8x32xf32>
    %34 = math.tanh %33 : vector<8x32xf32>
    %cst_18 = arith.constant 1.000000e+00 : f32
    %35 = vector.broadcast %cst_18 : f32 to vector<8x32xf32>
    %36 = arith.addf %35, %34 : vector<8x32xf32>
    %37 = arith.mulf %31, %36 : vector<8x32xf32>
    %c1 = arith.constant 1 : index
    %c0_19 = arith.constant 0 : index
    %c0_20 = arith.constant 0 : index
    %38 = vector.load %arg2[%c1, %c0_19, %c0_20] : memref<3x32x32xf32, #tpu.memory_space<vmem>>, vector<1x32x32xf32>
    %39 = vector.shape_cast %38 : vector<1x32x32xf32> to vector<32x32xf32>
    %cst_21 = arith.constant dense<0.000000e+00> : vector<8x32xf32>
    %40 = tpu.matmul %0, %39, %cst_21 {dimension_numbers = #tpu.dot_dimension_numbers<[1], [0], [0], [1], [0, 0, 1, 1], [], []>} : vector<8x32xf32>, vector<32x32xf32>, vector<8x32xf32> -> vector<8x32xf32>
    %cst_22 = arith.constant 5.000000e-01 : f32
    %41 = vector.broadcast %cst_22 : f32 to vector<8x32xf32>
    %42 = arith.mulf %41, %40 : vector<8x32xf32>
    %cst_23 = arith.constant 5.000000e-01 : f32
    %43 = vector.broadcast %cst_23 : f32 to vector<8x32xf32>
    %44 = arith.mulf %43, %40 : vector<8x32xf32>
    %45 = math.tanh %44 : vector<8x32xf32>
    %cst_24 = arith.constant 1.000000e+00 : f32
    %46 = vector.broadcast %cst_24 : f32 to vector<8x32xf32>
    %47 = arith.addf %46, %45 : vector<8x32xf32>
    %48 = arith.mulf %42, %47 : vector<8x32xf32>
    %c2 = arith.constant 2 : index
    %c0_25 = arith.constant 0 : index
    %c0_26 = arith.constant 0 : index
    %49 = vector.load %arg2[%c2, %c0_25, %c0_26] : memref<3x32x32xf32, #tpu.memory_space<vmem>>, vector<1x32x32xf32>
    %50 = vector.shape_cast %49 : vector<1x32x32xf32> to vector<32x32xf32>
    %cst_27 = arith.constant dense<0.000000e+00> : vector<8x32xf32>
    %51 = tpu.matmul %0, %50, %cst_27 {dimension_numbers = #tpu.dot_dimension_numbers<[1], [0], [0], [1], [0, 0, 1, 1], [], []>} : vector<8x32xf32>, vector<32x32xf32>, vector<8x32xf32> -> vector<8x32xf32>
    %cst_28 = arith.constant 5.000000e-01 : f32
    %52 = vector.broadcast %cst_28 : f32 to vector<8x32xf32>
    %53 = arith.mulf %52, %51 : vector<8x32xf32>
    %cst_29 = arith.constant 5.000000e-01 : f32
    %54 = vector.broadcast %cst_29 : f32 to vector<8x32xf32>
    %55 = arith.mulf %54, %51 : vector<8x32xf32>
    %56 = math.tanh %55 : vector<8x32xf32>
    %cst_30 = arith.constant 1.000000e+00 : f32
    %57 = vector.broadcast %cst_30 : f32 to vector<8x32xf32>
    %58 = arith.addf %57, %56 : vector<8x32xf32>
    %59 = arith.mulf %53, %58 : vector<8x32xf32>
    %cst_31 = arith.constant dense<0.000000e+00> : vector<8xf32>
    %60 = vector.multi_reduction <add>, %37, %cst_31 [1] : vector<8x32xf32> to vector<8xf32>
    %61 = vector.shape_cast %60 : vector<8xf32> to vector<8x1xf32>
    %cst_32 = arith.constant dense<0.000000e+00> : vector<8xf32>
    %62 = vector.multi_reduction <add>, %48, %cst_32 [1] : vector<8x32xf32> to vector<8xf32>
    %63 = vector.shape_cast %62 : vector<8xf32> to vector<8x1xf32>
    %64 = arith.addf %61, %63 : vector<8x1xf32>
    %cst_33 = arith.constant dense<0.000000e+00> : vector<8xf32>
    %65 = vector.multi_reduction <add>, %59, %cst_33 [1] : vector<8x32xf32> to vector<8xf32>
    %66 = vector.shape_cast %65 : vector<8xf32> to vector<8x1xf32>
    %67 = arith.addf %64, %66 : vector<8x1xf32>
    %68 = arith.mulf %37, %37 : vector<8x32xf32>
    %cst_34 = arith.constant dense<0.000000e+00> : vector<8xf32>
    %69 = vector.multi_reduction <add>, %68, %cst_34 [1] : vector<8x32xf32> to vector<8xf32>
    %70 = vector.shape_cast %69 : vector<8xf32> to vector<8x1xf32>
    %71 = arith.mulf %48, %48 : vector<8x32xf32>
    %cst_35 = arith.constant dense<0.000000e+00> : vector<8xf32>
    %72 = vector.multi_reduction <add>, %71, %cst_35 [1] : vector<8x32xf32> to vector<8xf32>
    %73 = vector.shape_cast %72 : vector<8xf32> to vector<8x1xf32>
    %74 = arith.addf %70, %73 : vector<8x1xf32>
    %75 = arith.mulf %59, %59 : vector<8x32xf32>
    %cst_36 = arith.constant dense<0.000000e+00> : vector<8xf32>
    %76 = vector.multi_reduction <add>, %75, %cst_36 [1] : vector<8x32xf32> to vector<8xf32>
    %77 = vector.shape_cast %76 : vector<8xf32> to vector<8x1xf32>
    %78 = arith.addf %74, %77 : vector<8x1xf32>
    %cst_37 = arith.constant 0.010416667 : f32
    %79 = vector.broadcast %cst_37 : f32 to vector<8x1xf32>
    %80 = arith.mulf %67, %79 : vector<8x1xf32>
    %cst_38 = arith.constant 0.010416667 : f32
    %81 = vector.broadcast %cst_38 : f32 to vector<8x1xf32>
    %82 = arith.mulf %78, %81 : vector<8x1xf32>
    %83 = arith.mulf %80, %80 : vector<8x1xf32>
    %84 = arith.subf %82, %83 : vector<8x1xf32>
    %cst_39 = arith.constant 0.000000e+00 : f32
    %85 = vector.broadcast %cst_39 : f32 to vector<8x1xf32>
    %86 = arith.maximumf %84, %85 : vector<8x1xf32>
    %cst_40 = arith.constant 9.99999974E-6 : f32
    %87 = vector.broadcast %cst_40 : f32 to vector<8x1xf32>
    %88 = arith.addf %86, %87 : vector<8x1xf32>
    %89 = math.rsqrt %88 : vector<8x1xf32>
    %c0_41 = arith.constant 0 : index
    %c0_42 = arith.constant 0 : index
    %90 = vector.load %arg8[%c0_41, %c0_42] : memref<1x2xf32, #tpu.memory_space<vmem>>, vector<1x1xf32>
    %c0_43 = arith.constant 0 : index
    %c1_44 = arith.constant 1 : index
    %91 = vector.load %arg8[%c0_43, %c1_44] : memref<1x2xf32, #tpu.memory_space<vmem>>, vector<1x1xf32>
    %92 = vector.extract_strided_slice %26 {offsets = [0, 0], sizes = [8, 1], strides = [1, 1]} : vector<8x128xf32> to vector<8x1xf32>
    %c0_45 = arith.constant 0 : index
    %c0_46 = arith.constant 0 : index
    %93 = vector.load %arg6[%c0_45, %c0_46] : memref<2x3xf32, #tpu.memory_space<vmem>>, vector<1x1xf32>
    %94 = vector.broadcast %93 : vector<1x1xf32> to vector<8x1xf32>
    %95 = arith.mulf %12, %94 : vector<8x1xf32>
    %96 = arith.subf %92, %95 : vector<8x1xf32>
    %97 = arith.mulf %24, %96 : vector<8x1xf32>
    %c1_47 = arith.constant 1 : index
    %c0_48 = arith.constant 0 : index
    %98 = vector.load %arg6[%c1_47, %c0_48] : memref<2x3xf32, #tpu.memory_space<vmem>>, vector<1x1xf32>
    %99 = vector.broadcast %98 : vector<1x1xf32> to vector<8x1xf32>
    %100 = arith.addf %97, %99 : vector<8x1xf32>
    %101 = vector.broadcast %80 : vector<8x1xf32> to vector<8x32xf32>
    %102 = arith.subf %37, %101 : vector<8x32xf32>
    %c0_49 = arith.constant 0 : index
    %c0_50 = arith.constant 0 : index
    %103 = vector.load %arg3[%c0_49, %c0_50] : memref<3x32xf32, #tpu.memory_space<vmem>>, vector<1x32xf32>
    %104 = vector.broadcast %89 : vector<8x1xf32> to vector<8x32xf32>
    %105 = vector.broadcast %103 : vector<1x32xf32> to vector<8x32xf32>
    %106 = arith.mulf %104, %105 : vector<8x32xf32>
    %107 = arith.mulf %102, %106 : vector<8x32xf32>
    %c0_51 = arith.constant 0 : index
    %c0_52 = arith.constant 0 : index
    %108 = vector.load %arg4[%c0_51, %c0_52] : memref<3x32xf32, #tpu.memory_space<vmem>>, vector<1x32xf32>
    %109 = vector.broadcast %108 : vector<1x32xf32> to vector<8x32xf32>
    %110 = arith.addf %107, %109 : vector<8x32xf32>
    %cst_53 = arith.constant 5.000000e-01 : f32
    %111 = vector.broadcast %cst_53 : f32 to vector<8x32xf32>
    %112 = arith.mulf %111, %110 : vector<8x32xf32>
    %cst_54 = arith.constant 5.000000e-01 : f32
    %113 = vector.broadcast %cst_54 : f32 to vector<8x32xf32>
    %114 = arith.mulf %113, %110 : vector<8x32xf32>
    %115 = math.tanh %114 : vector<8x32xf32>
    %cst_55 = arith.constant 1.000000e+00 : f32
    %116 = vector.broadcast %cst_55 : f32 to vector<8x32xf32>
    %117 = arith.addf %116, %115 : vector<8x32xf32>
    %118 = arith.mulf %112, %117 : vector<8x32xf32>
    %cst_56 = arith.constant dense<0.000000e+00> : vector<8xf32>
    %119 = vector.multi_reduction <add>, %118, %cst_56 [1] : vector<8x32xf32> to vector<8xf32>
    %120 = vector.shape_cast %119 : vector<8xf32> to vector<8x1xf32>
    %cst_57 = arith.constant 3.200000e+01 : f32
    %121 = vector.broadcast %cst_57 : f32 to vector<8x1xf32>
    %122 = arith.divf %120, %121 : vector<8x1xf32>
    %123 = arith.mulf %118, %118 : vector<8x32xf32>
    %cst_58 = arith.constant dense<0.000000e+00> : vector<8xf32>
    %124 = vector.multi_reduction <add>, %123, %cst_58 [1] : vector<8x32xf32> to vector<8xf32>
    %125 = vector.shape_cast %124 : vector<8xf32> to vector<8x1xf32>
    %cst_59 = arith.constant 3.200000e+01 : f32
    %126 = vector.broadcast %cst_59 : f32 to vector<8x1xf32>
    %127 = arith.divf %125, %126 : vector<8x1xf32>
    %128 = arith.mulf %122, %122 : vector<8x1xf32>
    %129 = arith.subf %127, %128 : vector<8x1xf32>
    %cst_60 = arith.constant 0.000000e+00 : f32
    %130 = vector.broadcast %cst_60 : f32 to vector<8x1xf32>
    %131 = arith.maximumf %129, %130 : vector<8x1xf32>
    %cst_61 = arith.constant 9.99999974E-6 : f32
    %132 = vector.broadcast %cst_61 : f32 to vector<8x1xf32>
    %133 = arith.addf %131, %132 : vector<8x1xf32>
    %134 = math.rsqrt %133 : vector<8x1xf32>
    %c0_62 = arith.constant 0 : index
    %c0_63 = arith.constant 0 : index
    %135 = vector.load %arg7[%c0_62, %c0_63] : memref<1x32xf32, #tpu.memory_space<vmem>>, vector<1x32xf32>
    %136 = vector.broadcast %135 : vector<1x32xf32> to vector<8x32xf32>
    %137 = arith.mulf %118, %136 : vector<8x32xf32>
    %cst_64 = arith.constant dense<0.000000e+00> : vector<8xf32>
    %138 = vector.multi_reduction <add>, %137, %cst_64 [1] : vector<8x32xf32> to vector<8xf32>
    %139 = vector.shape_cast %138 : vector<8xf32> to vector<8x1xf32>
    %140 = vector.broadcast %90 : vector<1x1xf32> to vector<8x1xf32>
    %141 = arith.mulf %122, %140 : vector<8x1xf32>
    %142 = arith.subf %139, %141 : vector<8x1xf32>
    %143 = arith.mulf %134, %142 : vector<8x1xf32>
    %144 = vector.broadcast %91 : vector<1x1xf32> to vector<8x1xf32>
    %145 = arith.addf %143, %144 : vector<8x1xf32>
    %146 = arith.mulf %145, %100 : vector<8x1xf32>
    %c0_65 = arith.constant 0 : index
    %c0_66 = arith.constant 0 : index
    %147 = vector.load %arg9[%c0_65, %c0_66] : memref<8x3xf32, #tpu.memory_space<vmem>>, vector<8x1xf32>
    tpu.vector_store %arg9[%c0_65, %c0_66], %146 {strides = array<i32>} : memref<8x3xf32, #tpu.memory_space<vmem>>, vector<8x1xf32>,
    %148 = vector.extract_strided_slice %26 {offsets = [0, 1], sizes = [8, 1], strides = [1, 1]} : vector<8x128xf32> to vector<8x1xf32>
    %c0_67 = arith.constant 0 : index
    %c1_68 = arith.constant 1 : index
    %149 = vector.load %arg6[%c0_67, %c1_68] : memref<2x3xf32, #tpu.memory_space<vmem>>, vector<1x1xf32>
    %150 = vector.broadcast %149 : vector<1x1xf32> to vector<8x1xf32>
    %151 = arith.mulf %12, %150 : vector<8x1xf32>
    %152 = arith.subf %148, %151 : vector<8x1xf32>
    %153 = arith.mulf %24, %152 : vector<8x1xf32>
    %c1_69 = arith.constant 1 : index
    %c1_70 = arith.constant 1 : index
    %154 = vector.load %arg6[%c1_69, %c1_70] : memref<2x3xf32, #tpu.memory_space<vmem>>, vector<1x1xf32>
    %155 = vector.broadcast %154 : vector<1x1xf32> to vector<8x1xf32>
    %156 = arith.addf %153, %155 : vector<8x1xf32>
    %157 = vector.broadcast %80 : vector<8x1xf32> to vector<8x32xf32>
    %158 = arith.subf %48, %157 : vector<8x32xf32>
    %c1_71 = arith.constant 1 : index
    %c0_72 = arith.constant 0 : index
    %159 = vector.load %arg3[%c1_71, %c0_72] : memref<3x32xf32, #tpu.memory_space<vmem>>, vector<1x32xf32>
    %160 = vector.broadcast %89 : vector<8x1xf32> to vector<8x32xf32>
    %161 = vector.broadcast %159 : vector<1x32xf32> to vector<8x32xf32>
    %162 = arith.mulf %160, %161 : vector<8x32xf32>
    %163 = arith.mulf %158, %162 : vector<8x32xf32>
    %c1_73 = arith.constant 1 : index
    %c0_74 = arith.constant 0 : index
    %164 = vector.load %arg4[%c1_73, %c0_74] : memref<3x32xf32, #tpu.memory_space<vmem>>, vector<1x32xf32>
    %165 = vector.broadcast %164 : vector<1x32xf32> to vector<8x32xf32>
    %166 = arith.addf %163, %165 : vector<8x32xf32>
    %cst_75 = arith.constant 5.000000e-01 : f32
    %167 = vector.broadcast %cst_75 : f32 to vector<8x32xf32>
    %168 = arith.mulf %167, %166 : vector<8x32xf32>
    %cst_76 = arith.constant 5.000000e-01 : f32
    %169 = vector.broadcast %cst_76 : f32 to vector<8x32xf32>
    %170 = arith.mulf %169, %166 : vector<8x32xf32>
    %171 = math.tanh %170 : vector<8x32xf32>
    %cst_77 = arith.constant 1.000000e+00 : f32
    %172 = vector.broadcast %cst_77 : f32 to vector<8x32xf32>
    %173 = arith.addf %172, %171 : vector<8x32xf32>
    %174 = arith.mulf %168, %173 : vector<8x32xf32>
    %cst_78 = arith.constant dense<0.000000e+00> : vector<8xf32>
    %175 = vector.multi_reduction <add>, %174, %cst_78 [1] : vector<8x32xf32> to vector<8xf32>
    %176 = vector.shape_cast %175 : vector<8xf32> to vector<8x1xf32>
    %cst_79 = arith.constant 3.200000e+01 : f32
    %177 = vector.broadcast %cst_79 : f32 to vector<8x1xf32>
    %178 = arith.divf %176, %177 : vector<8x1xf32>
    %179 = arith.mulf %174, %174 : vector<8x32xf32>
    %cst_80 = arith.constant dense<0.000000e+00> : vector<8xf32>
    %180 = vector.multi_reduction <add>, %179, %cst_80 [1] : vector<8x32xf32> to vector<8xf32>
    %181 = vector.shape_cast %180 : vector<8xf32> to vector<8x1xf32>
    %cst_81 = arith.constant 3.200000e+01 : f32
    %182 = vector.broadcast %cst_81 : f32 to vector<8x1xf32>
    %183 = arith.divf %181, %182 : vector<8x1xf32>
    %184 = arith.mulf %178, %178 : vector<8x1xf32>
    %185 = arith.subf %183, %184 : vector<8x1xf32>
    %cst_82 = arith.constant 0.000000e+00 : f32
    %186 = vector.broadcast %cst_82 : f32 to vector<8x1xf32>
    %187 = arith.maximumf %185, %186 : vector<8x1xf32>
    %cst_83 = arith.constant 9.99999974E-6 : f32
    %188 = vector.broadcast %cst_83 : f32 to vector<8x1xf32>
    %189 = arith.addf %187, %188 : vector<8x1xf32>
    %190 = math.rsqrt %189 : vector<8x1xf32>
    %c0_84 = arith.constant 0 : index
    %c0_85 = arith.constant 0 : index
    %191 = vector.load %arg7[%c0_84, %c0_85] : memref<1x32xf32, #tpu.memory_space<vmem>>, vector<1x32xf32>
    %192 = vector.broadcast %191 : vector<1x32xf32> to vector<8x32xf32>
    %193 = arith.mulf %174, %192 : vector<8x32xf32>
    %cst_86 = arith.constant dense<0.000000e+00> : vector<8xf32>
    %194 = vector.multi_reduction <add>, %193, %cst_86 [1] : vector<8x32xf32> to vector<8xf32>
    %195 = vector.shape_cast %194 : vector<8xf32> to vector<8x1xf32>
    %196 = vector.broadcast %90 : vector<1x1xf32> to vector<8x1xf32>
    %197 = arith.mulf %178, %196 : vector<8x1xf32>
    %198 = arith.subf %195, %197 : vector<8x1xf32>
    %199 = arith.mulf %190, %198 : vector<8x1xf32>
    %200 = vector.broadcast %91 : vector<1x1xf32> to vector<8x1xf32>
    %201 = arith.addf %199, %200 : vector<8x1xf32>
    %202 = arith.mulf %201, %156 : vector<8x1xf32>
    %c0_87 = arith.constant 0 : index
    %c1_88 = arith.constant 1 : index
    %203 = vector.load %arg9[%c0_87, %c1_88] : memref<8x3xf32, #tpu.memory_space<vmem>>, vector<8x1xf32>
    tpu.vector_store %arg9[%c0_87, %c1_88], %202 {strides = array<i32>} : memref<8x3xf32, #tpu.memory_space<vmem>>, vector<8x1xf32>,
    %204 = vector.extract_strided_slice %26 {offsets = [0, 2], sizes = [8, 1], strides = [1, 1]} : vector<8x128xf32> to vector<8x1xf32>
    %c0_89 = arith.constant 0 : index
    %c2_90 = arith.constant 2 : index
    %205 = vector.load %arg6[%c0_89, %c2_90] : memref<2x3xf32, #tpu.memory_space<vmem>>, vector<1x1xf32>
    %206 = vector.broadcast %205 : vector<1x1xf32> to vector<8x1xf32>
    %207 = arith.mulf %12, %206 : vector<8x1xf32>
    %208 = arith.subf %204, %207 : vector<8x1xf32>
    %209 = arith.mulf %24, %208 : vector<8x1xf32>
    %c1_91 = arith.constant 1 : index
    %c2_92 = arith.constant 2 : index
    %210 = vector.load %arg6[%c1_91, %c2_92] : memref<2x3xf32, #tpu.memory_space<vmem>>, vector<1x1xf32>
    %211 = vector.broadcast %210 : vector<1x1xf32> to vector<8x1xf32>
    %212 = arith.addf %209, %211 : vector<8x1xf32>
    %213 = vector.broadcast %80 : vector<8x1xf32> to vector<8x32xf32>
    %214 = arith.subf %59, %213 : vector<8x32xf32>
    %c2_93 = arith.constant 2 : index
    %c0_94 = arith.constant 0 : index
    %215 = vector.load %arg3[%c2_93, %c0_94] : memref<3x32xf32, #tpu.memory_space<vmem>>, vector<1x32xf32>
    %216 = vector.broadcast %89 : vector<8x1xf32> to vector<8x32xf32>
    %217 = vector.broadcast %215 : vector<1x32xf32> to vector<8x32xf32>
    %218 = arith.mulf %216, %217 : vector<8x32xf32>
    %219 = arith.mulf %214, %218 : vector<8x32xf32>
    %c2_95 = arith.constant 2 : index
    %c0_96 = arith.constant 0 : index
    %220 = vector.load %arg4[%c2_95, %c0_96] : memref<3x32xf32, #tpu.memory_space<vmem>>, vector<1x32xf32>
    %221 = vector.broadcast %220 : vector<1x32xf32> to vector<8x32xf32>
    %222 = arith.addf %219, %221 : vector<8x32xf32>
    %cst_97 = arith.constant 5.000000e-01 : f32
    %223 = vector.broadcast %cst_97 : f32 to vector<8x32xf32>
    %224 = arith.mulf %223, %222 : vector<8x32xf32>
    %cst_98 = arith.constant 5.000000e-01 : f32
    %225 = vector.broadcast %cst_98 : f32 to vector<8x32xf32>
    %226 = arith.mulf %225, %222 : vector<8x32xf32>
    %227 = math.tanh %226 : vector<8x32xf32>
    %cst_99 = arith.constant 1.000000e+00 : f32
    %228 = vector.broadcast %cst_99 : f32 to vector<8x32xf32>
    %229 = arith.addf %228, %227 : vector<8x32xf32>
    %230 = arith.mulf %224, %229 : vector<8x32xf32>
    %cst_100 = arith.constant dense<0.000000e+00> : vector<8xf32>
    %231 = vector.multi_reduction <add>, %230, %cst_100 [1] : vector<8x32xf32> to vector<8xf32>
    %232 = vector.shape_cast %231 : vector<8xf32> to vector<8x1xf32>
    %cst_101 = arith.constant 3.200000e+01 : f32
    %233 = vector.broadcast %cst_101 : f32 to vector<8x1xf32>
    %234 = arith.divf %232, %233 : vector<8x1xf32>
    %235 = arith.mulf %230, %230 : vector<8x32xf32>
    %cst_102 = arith.constant dense<0.000000e+00> : vector<8xf32>
    %236 = vector.multi_reduction <add>, %235, %cst_102 [1] : vector<8x32xf32> to vector<8xf32>
    %237 = vector.shape_cast %236 : vector<8xf32> to vector<8x1xf32>
    %cst_103 = arith.constant 3.200000e+01 : f32
    %238 = vector.broadcast %cst_103 : f32 to vector<8x1xf32>
    %239 = arith.divf %237, %238 : vector<8x1xf32>
    %240 = arith.mulf %234, %234 : vector<8x1xf32>
    %241 = arith.subf %239, %240 : vector<8x1xf32>
    %cst_104 = arith.constant 0.000000e+00 : f32
    %242 = vector.broadcast %cst_104 : f32 to vector<8x1xf32>
    %243 = arith.maximumf %241, %242 : vector<8x1xf32>
    %cst_105 = arith.constant 9.99999974E-6 : f32
    %244 = vector.broadcast %cst_105 : f32 to vector<8x1xf32>
    %245 = arith.addf %243, %244 : vector<8x1xf32>
    %246 = math.rsqrt %245 : vector<8x1xf32>
    %c0_106 = arith.constant 0 : index
    %c0_107 = arith.constant 0 : index
    %247 = vector.load %arg7[%c0_106, %c0_107] : memref<1x32xf32, #tpu.memory_space<vmem>>, vector<1x32xf32>
    %248 = vector.broadcast %247 : vector<1x32xf32> to vector<8x32xf32>
    %249 = arith.mulf %230, %248 : vector<8x32xf32>
    %cst_108 = arith.constant dense<0.000000e+00> : vector<8xf32>
    %250 = vector.multi_reduction <add>, %249, %cst_108 [1] : vector<8x32xf32> to vector<8xf32>
    %251 = vector.shape_cast %250 : vector<8xf32> to vector<8x1xf32>
    %252 = vector.broadcast %90 : vector<1x1xf32> to vector<8x1xf32>
    %253 = arith.mulf %234, %252 : vector<8x1xf32>
    %254 = arith.subf %251, %253 : vector<8x1xf32>
    %255 = arith.mulf %246, %254 : vector<8x1xf32>
    %256 = vector.broadcast %91 : vector<1x1xf32> to vector<8x1xf32>
    %257 = arith.addf %255, %256 : vector<8x1xf32>
    %258 = arith.mulf %257, %212 : vector<8x1xf32>
    %c0_109 = arith.constant 0 : index
    %c2_110 = arith.constant 2 : index
    %259 = vector.load %arg9[%c0_109, %c2_110] : memref<8x3xf32, #tpu.memory_space<vmem>>, vector<8x1xf32>
    tpu.vector_store %arg9[%c0_109, %c2_110], %258 {strides = array<i32>} : memref<8x3xf32, #tpu.memory_space<vmem>>, vector<8x1xf32>,
    return
  }
  func.func @transform_0(%arg0: i32) -> (i32, i32) {
    %c0_i32 = arith.constant 0 : i32
    %c0_i32_0 = arith.constant 0 : i32
    return %arg0, %c0_i32 : i32, i32
  }
  func.func @transform_1(%arg0: i32) -> (i32, i32, i32) {
    %c0_i32 = arith.constant 0 : i32
    %c0_i32_0 = arith.constant 0 : i32
    %c0_i32_1 = arith.constant 0 : i32
    %c0_i32_2 = arith.constant 0 : i32
    return %c0_i32, %c0_i32_0, %c0_i32_1 : i32, i32, i32
  }
  func.func @transform_2(%arg0: i32) -> (i32, i32) {
    %c0_i32 = arith.constant 0 : i32
    %c0_i32_0 = arith.constant 0 : i32
    %c0_i32_1 = arith.constant 0 : i32
    return %c0_i32, %c0_i32_0 : i32, i32
  }
  func.func @transform_3(%arg0: i32) -> (i32, i32) {
    %c0_i32 = arith.constant 0 : i32
    %c0_i32_0 = arith.constant 0 : i32
    %c0_i32_1 = arith.constant 0 : i32
    return %c0_i32, %c0_i32_0 : i32, i32
  }
  func.func @transform_4(%arg0: i32) -> (i32, i32) {
    %c0_i32 = arith.constant 0 : i32
    %c0_i32_0 = arith.constant 0 : i32
    %c0_i32_1 = arith.constant 0 : i32
    return %c0_i32, %c0_i32_0 : i32, i32
  }
  func.func @transform_5(%arg0: i32) -> (i32, i32) {
    %c0_i32 = arith.constant 0 : i32
    %c0_i32_0 = arith.constant 0 : i32
    %c0_i32_1 = arith.constant 0 : i32
    return %c0_i32, %c0_i32_0 : i32, i32
  }
  func.func @transform_6(%arg0: i32) -> (i32, i32) {
    %c0_i32 = arith.constant 0 : i32
    %c0_i32_0 = arith.constant 0 : i32
    %c0_i32_1 = arith.constant 0 : i32
    return %c0_i32, %c0_i32_0 : i32, i32
  }
  func.func @transform_7(%arg0: i32) -> (i32, i32) {
    %c0_i32 = arith.constant 0 : i32
    %c0_i32_0 = arith.constant 0 : i32
    %c0_i32_1 = arith.constant 0 : i32
    return %c0_i32, %c0_i32_0 : i32, i32
  }
  func.func @transform_8(%arg0: i32) -> (i32, i32) {
    %c0_i32 = arith.constant 0 : i32
    %c0_i32_0 = arith.constant 0 : i32
    return %arg0, %c0_i32 : i32, i32
  }
}

</mosaic_0001>

<llo_original>
// kernel: tpu_custom_call.1
$region0: #{tpu_custom_call.1}
  #allocation0 [shape = 'u32[]', space=smem, size = 0x4, offset = 0x4, fixed_abs, tag = 'smem constant byte address 0x4 - core index']
  #allocation1 [shape = 'u32[144,128]{1,0:T(1,128)}', space=vmem, size = 0x12000, scoped, tag = 'internal scratch']
  %s0 = inlined_call_operand.hbm [shape: f32[16,32], index: 0, kind: input, shape index: {}]
  %s1 = inlined_call_operand.hbm [shape: f32[3,32,32], index: 1, kind: input, shape index: {}]
  %s2 = inlined_call_operand.vmem [shape: f32[3,32], index: 2, kind: input, shape index: {}]
  %s3 = inlined_call_operand.vmem [shape: f32[3,32], index: 3, kind: input, shape index: {}]
  %s4 = inlined_call_operand.hbm [shape: f32[32,128], index: 4, kind: input, shape index: {}]
  %s5 = inlined_call_operand.vmem [shape: f32[2,3], index: 5, kind: input, shape index: {}]
  %s6 = inlined_call_operand.vmem [shape: f32[1,32], index: 6, kind: input, shape index: {}]
  %s7 = inlined_call_operand.vmem [shape: f32[1,2], index: 7, kind: input, shape index: {}]
  %s8 = inlined_call_operand.vmem [shape: f32[16,3], index: 8, kind: output, shape index: {}]
  %s9 = sld [smem:[#allocation0]]
  $region77: #{tpu_custom_call.1} parent=0
    _
  %s11 = ssub.s32 1, %s9
  %s12 = scalar_select 0, %s11, %s9
  $region1: #{tpu_custom_call.1} parent=0
    #allocation2 [shape = 'u8[8192]{0}', space=vmem, size = 0x2000, scoped, tag = 'input window, operand 0']
    #allocation3 [shape = 's32[2]{0}', space=sflag, size = 0x8, scoped, tag = 'scoped memory for tpu_custom_call.1']
    #allocation4 [shape = 'u8[49152]{0}', space=vmem, size = 0xc000, scoped, tag = 'input window, operand 1, single buffered']
    #allocation5 [shape = 's32[1]{0}', space=sflag, size = 0x4, scoped, tag = 'scoped memory for tpu_custom_call.1']
    #allocation6 [shape = 'u8[16384]{0}', space=vmem, size = 0x4000, scoped, tag = 'input window, operand 4, single buffered']
    %13 = vsyncpa [#allocation3], 0
    %s14 = scalar_lea.sflag [#allocation3], 1
    %15 = vsyncpa %s14, 0
    %16 = vsyncpa [#allocation5], 0
    loop: start=0, step=1, limit=4
    $region2: #{tpu_custom_call.1} parent=1 // loop_pre_header
      _
    $region3: #{tpu_custom_call.1} parent=1 // loop_header
      %s18 = sphi 0, %s22
      %p19 = scmp.ge.s32.totalorder %s18, 4
      %s28 = sphi 0, %s30
      %s31 = sphi 0, %s28
      %s32 = sphi 0, %s31
      %s48 = sphi 0, %s32
      %s52 = sphi 0, %s52
      %s54 = sphi 0, %s52
      %s55 = sphi 0, %s54
      %s69 = sphi 0, %s55
      %s73 = sphi 0, %s73
      %s75 = sphi 0, %s73
      %s76 = sphi 0, %s75
      %s90 = sphi 0, %s76
      %s94 = sphi 0, %s94
      %s96 = sphi 0, %s94
      %s97 = sphi 0, %s96
      %s111 = sphi 0, %s97
      %s115 = sphi 0, %s115
      %s117 = sphi 0, %s115
      %s118 = sphi 0, %s117
      %s132 = sphi 0, %s118
      %s136 = sphi 0, %s136
      %s138 = sphi 0, %s136
      %s139 = sphi 0, %s138
      %s153 = sphi 0, %s139
      %s157 = sphi 0, %s157
      %s159 = sphi 0, %s157
      %s160 = sphi 0, %s159
      %s174 = sphi 0, %s160
      %s178 = sphi 0, %s178
      %s180 = sphi 0, %s178
      %s181 = sphi 0, %s180
      %s195 = sphi 0, %s181
      %s201 = sphi 0, %s203
      %s204 = sphi 0, %s201
      %s205 = sphi 0, %s204
      %s221 = sphi 0, %s205
    $region4: #{tpu_custom_call.1} parent=1 // loop_header_branch
      %21 = sbr.rel (%p19) target = $region8
    $region5: #{tpu_custom_call.1} parent=1 // loop_body
      %s23 = ssub.s32 %s18, 1
      %s24 = ssub.s32 %s18, 2
      %s25 = sadd.s32 %s18, 1
      %s26 = ssub.s32 %s18, %s25
      %p27 = scmp.eq.s32.totalorder %s26, 0
      %s29 = sadd.s32 %s28, 1
      %s30 = scalar_select %p27, %s28, %s29
      %p33 = pneg %p27
      %p34 = scmp.eq.s32.totalorder %s18, 1
      %p35 = por %p33, %p34
      %p36 = scmp.ne.s32.totalorder %s28, %s31
      %p37 = scmp.eq.s32.totalorder %s18, 0
      %p38 = por %p36, %p37
      %p39 = scmp.ne.s32.totalorder %s28, %s31
      %p40 = scmp.eq.s32.totalorder %s23, 1
      %p41 = por %p39, %p40
      %p42 = scmp.ne.s32.totalorder %s31, %s32
      %p43 = scmp.eq.s32.totalorder %s23, 0
      %p44 = por %p42, %p43
      %p45 = scmp.ne.s32.totalorder %s31, %s32
      %p46 = scmp.eq.s32.totalorder %s24, 1
      %p47 = por %p45, %p46
      %p49 = scmp.ne.s32.totalorder %s32, %s48
      %p50 = scmp.eq.s32.totalorder %s24, 0
      %p51 = por %p49, %p50
      %s53 = sadd.s32 %s52, 1
      %p56 = scmp.eq.s32.totalorder %s18, 1
      %p57 = scmp.ne.s32.totalorder %s52, %s54
      %p58 = scmp.eq.s32.totalorder %s18, 0
      %p59 = por %p57, %p58
      %p60 = scmp.ne.s32.totalorder %s52, %s54
      %p61 = scmp.eq.s32.totalorder %s23, 1
      %p62 = por %p60, %p61
      %p63 = scmp.ne.s32.totalorder %s54, %s55
      %p64 = scmp.eq.s32.totalorder %s23, 0
      %p65 = por %p63, %p64
      %p66 = scmp.ne.s32.totalorder %s54, %s55
      %p67 = scmp.eq.s32.totalorder %s24, 1
      %p68 = por %p66, %p67
      %p70 = scmp.ne.s32.totalorder %s55, %s69
      %p71 = scmp.eq.s32.totalorder %s24, 0
      %p72 = por %p70, %p71
      %s74 = sadd.s32 %s73, 1
      %p77 = scmp.eq.s32.totalorder %s18, 1
      %p78 = scmp.ne.s32.totalorder %s73, %s75
      %p79 = scmp.eq.s32.totalorder %s18, 0
      %p80 = por %p78, %p79
      %p81 = scmp.ne.s32.totalorder %s73, %s75
      %p82 = scmp.eq.s32.totalorder %s23, 1
      %p83 = por %p81, %p82
      %p84 = scmp.ne.s32.totalorder %s75, %s76
      %p85 = scmp.eq.s32.totalorder %s23, 0
      %p86 = por %p84, %p85
      %p87 = scmp.ne.s32.totalorder %s75, %s76
      %p88 = scmp.eq.s32.totalorder %s24, 1
      %p89 = por %p87, %p88
      %p91 = scmp.ne.s32.totalorder %s76, %s90
      %p92 = scmp.eq.s32.totalorder %s24, 0
      %p93 = por %p91, %p92
      %s95 = sadd.s32 %s94, 1
      %p98 = scmp.eq.s32.totalorder %s18, 1
      %p99 = scmp.ne.s32.totalorder %s94, %s96
      %p100 = scmp.eq.s32.totalorder %s18, 0
      %p101 = por %p99, %p100
      %p102 = scmp.ne.s32.totalorder %s94, %s96
      %p103 = scmp.eq.s32.totalorder %s23, 1
      %p104 = por %p102, %p103
      %p105 = scmp.ne.s32.totalorder %s96, %s97
      %p106 = scmp.eq.s32.totalorder %s23, 0
      %p107 = por %p105, %p106
      %p108 = scmp.ne.s32.totalorder %s96, %s97
      %p109 = scmp.eq.s32.totalorder %s24, 1
      %p110 = por %p108, %p109
      %p112 = scmp.ne.s32.totalorder %s97, %s111
      %p113 = scmp.eq.s32.totalorder %s24, 0
      %p114 = por %p112, %p113
      %s116 = sadd.s32 %s115, 1
      %p119 = scmp.eq.s32.totalorder %s18, 1
      %p120 = scmp.ne.s32.totalorder %s115, %s117
      %p121 = scmp.eq.s32.totalorder %s18, 0
      %p122 = por %p120, %p121
      %p123 = scmp.ne.s32.totalorder %s115, %s117
      %p124 = scmp.eq.s32.totalorder %s23, 1
      %p125 = por %p123, %p124
      %p126 = scmp.ne.s32.totalorder %s117, %s118
      %p127 = scmp.eq.s32.totalorder %s23, 0
      %p128 = por %p126, %p127
      %p129 = scmp.ne.s32.totalorder %s117, %s118
      %p130 = scmp.eq.s32.totalorder %s24, 1
      %p131 = por %p129, %p130
      %p133 = scmp.ne.s32.totalorder %s118, %s132
      %p134 = scmp.eq.s32.totalorder %s24, 0
      %p135 = por %p133, %p134
      %s137 = sadd.s32 %s136, 1
      %p140 = scmp.eq.s32.totalorder %s18, 1
      %p141 = scmp.ne.s32.totalorder %s136, %s138
      %p142 = scmp.eq.s32.totalorder %s18, 0
      %p143 = por %p141, %p142
      %p144 = scmp.ne.s32.totalorder %s136, %s138
      %p145 = scmp.eq.s32.totalorder %s23, 1
      %p146 = por %p144, %p145
      %p147 = scmp.ne.s32.totalorder %s138, %s139
      %p148 = scmp.eq.s32.totalorder %s23, 0
      %p149 = por %p147, %p148
      %p150 = scmp.ne.s32.totalorder %s138, %s139
      %p151 = scmp.eq.s32.totalorder %s24, 1
      %p152 = por %p150, %p151
      %p154 = scmp.ne.s32.totalorder %s139, %s153
      %p155 = scmp.eq.s32.totalorder %s24, 0
      %p156 = por %p154, %p155
      %s158 = sadd.s32 %s157, 1
      %p161 = scmp.eq.s32.totalorder %s18, 1
      %p162 = scmp.ne.s32.totalorder %s157, %s159
      %p163 = scmp.eq.s32.totalorder %s18, 0
      %p164 = por %p162, %p163
      %p165 = scmp.ne.s32.totalorder %s157, %s159
      %p166 = scmp.eq.s32.totalorder %s23, 1
      %p167 = por %p165, %p166
      %p168 = scmp.ne.s32.totalorder %s159, %s160
      %p169 = scmp.eq.s32.totalorder %s23, 0
      %p170 = por %p168, %p169
      %p171 = scmp.ne.s32.totalorder %s159, %s160
      %p172 = scmp.eq.s32.totalorder %s24, 1
      %p173 = por %p171, %p172
      %p175 = scmp.ne.s32.totalorder %s160, %s174
      %p176 = scmp.eq.s32.totalorder %s24, 0
      %p177 = por %p175, %p176
      %s179 = sadd.s32 %s178, 1
      %p182 = scmp.eq.s32.totalorder %s18, 1
      %p183 = scmp.ne.s32.totalorder %s178, %s180
      %p184 = scmp.eq.s32.totalorder %s18, 0
      %p185 = por %p183, %p184
      %p186 = scmp.ne.s32.totalorder %s178, %s180
      %p187 = scmp.eq.s32.totalorder %s23, 1
      %p188 = por %p186, %p187
      %p189 = scmp.ne.s32.totalorder %s180, %s181
      %p190 = scmp.eq.s32.totalorder %s23, 0
      %p191 = por %p189, %p190
      %p192 = scmp.ne.s32.totalorder %s180, %s181
      %p193 = scmp.eq.s32.totalorder %s24, 1
      %p194 = por %p192, %p193
      %p196 = scmp.ne.s32.totalorder %s181, %s195
      %p197 = scmp.eq.s32.totalorder %s24, 0
      %p198 = por %p196, %p197
      %s199 = ssub.s32 %s18, %s25
      %p200 = scmp.eq.s32.totalorder %s199, 0
      %s202 = sadd.s32 %s201, 1
      %s203 = scalar_select %p200, %s201, %s202
      %p206 = pneg %p200
      %p207 = scmp.eq.s32.totalorder %s18, 1
      %p208 = por %p206, %p207
      %p209 = scmp.ne.s32.totalorder %s201, %s204
      %p210 = scmp.eq.s32.totalorder %s18, 0
      %p211 = por %p209, %p210
      %p212 = scmp.ne.s32.totalorder %s201, %s204
      %p213 = scmp.eq.s32.totalorder %s23, 1
      %p214 = por %p212, %p213
      %p215 = scmp.ne.s32.totalorder %s204, %s205
      %p216 = scmp.eq.s32.totalorder %s23, 0
      %p217 = por %p215, %p216
      %p218 = scmp.ne.s32.totalorder %s204, %s205
      %p219 = scmp.eq.s32.totalorder %s24, 1
      %p220 = por %p218, %p219
      %p222 = scmp.ne.s32.totalorder %s205, %s221
      %p223 = scmp.eq.s32.totalorder %s24, 0
      %p224 = por %p222, %p223
      %p225 = scmp.le.s32.totalorder 1, %s18
      %p226 = scmp.lt.s32.totalorder %s18, 3
      %p227 = pnand %p225, %p226
      %p228 = pneg %p227
      // Predicated region
      $region9: #{tpu_custom_call.1} parent=5 // pred_check
        _
      $region10: #{tpu_custom_call.1} parent=5 // pred_check_branch
        %230 = sbr.rel (%p227) target = $region12
      $region11: #{tpu_custom_call.1} parent=5 // pred_region
        %s231 = ssub.s32 %s18, 1
        // Predicated region
        $region13: #{tpu_custom_call.1} parent=11 // pred_check
          %p232 = pneg %p65
        $region14: #{tpu_custom_call.1} parent=11 // pred_check_branch
          %234 = sbr.rel (%p232) target = $region16
        $region15: #{tpu_custom_call.1} parent=11 // pred_region
          %s236 = ssub.s32 1536, 1536
          %237 = vsyncadd [#allocation5], %s236
          %s238 = sshll.u32 [#allocation4], 4
          %s239 = int_to_ptr.vmem [resolvable:$true] %s238
          %244 = dma.hbm_to_vmem [thread:$0]  %s1, 1536, %s239, [#allocation5], 128, 128, 8
        $region16: #{tpu_custom_call.1} parent=11 // pred_fallthru
          _
        // Predicated region
        $region17: #{tpu_custom_call.1} parent=11 // pred_check
          %p245 = pneg %p86
        $region18: #{tpu_custom_call.1} parent=11 // pred_check_branch
          %247 = sbr.rel (%p245) target = $region20
        $region19: #{tpu_custom_call.1} parent=11 // pred_region
          _
        $region20: #{tpu_custom_call.1} parent=11 // pred_fallthru
          _
        // Predicated region
        $region21: #{tpu_custom_call.1} parent=11 // pred_check
          %p248 = pneg %p107
        $region22: #{tpu_custom_call.1} parent=11 // pred_check_branch
          %250 = sbr.rel (%p248) target = $region24
        $region23: #{tpu_custom_call.1} parent=11 // pred_region
          _
        $region24: #{tpu_custom_call.1} parent=11 // pred_fallthru
          _
        // Predicated region
        $region25: #{tpu_custom_call.1} parent=11 // pred_check
          %p251 = pneg %p128
        $region26: #{tpu_custom_call.1} parent=11 // pred_check_branch
          %253 = sbr.rel (%p251) target = $region28
        $region27: #{tpu_custom_call.1} parent=11 // pred_region
          %s255 = ssub.s32 512, 512
          %256 = vsyncadd [#allocation5], %s255
          %s257 = sshll.u32 [#allocation6], 4
          %s258 = int_to_ptr.vmem [resolvable:$true] %s257
          %263 = dma.hbm_to_vmem [thread:$0]  %s4, 512, %s258, [#allocation5], 128, 128, 8
        $region28: #{tpu_custom_call.1} parent=11 // pred_fallthru
          _
        // Predicated region
        $region29: #{tpu_custom_call.1} parent=11 // pred_check
          %p264 = pneg %p149
        $region30: #{tpu_custom_call.1} parent=11 // pred_check_branch
          %266 = sbr.rel (%p264) target = $region32
        $region31: #{tpu_custom_call.1} parent=11 // pred_region
          _
        $region32: #{tpu_custom_call.1} parent=11 // pred_fallthru
          _
        // Predicated region
        $region33: #{tpu_custom_call.1} parent=11 // pred_check
          %p267 = pneg %p170
        $region34: #{tpu_custom_call.1} parent=11 // pred_check_branch
          %269 = sbr.rel (%p267) target = $region36
        $region35: #{tpu_custom_call.1} parent=11 // pred_region
          _
        $region36: #{tpu_custom_call.1} parent=11 // pred_fallthru
          _
        // Predicated region
        $region37: #{tpu_custom_call.1} parent=11 // pred_check
          %p270 = pneg %p191
        $region38: #{tpu_custom_call.1} parent=11 // pred_check_branch
          %272 = sbr.rel (%p270) target = $region40
        $region39: #{tpu_custom_call.1} parent=11 // pred_region
          _
        $region40: #{tpu_custom_call.1} parent=11 // pred_fallthru
          _
      $region12: #{tpu_custom_call.1} parent=5 // pred_fallthru
        _
      %p273 = scmp.lt.s32.totalorder %s18, 2
      // Predicated region
      $region41: #{tpu_custom_call.1} parent=5 // pred_check
        %p274 = pneg %p273
      $region42: #{tpu_custom_call.1} parent=5 // pred_check_branch
        %276 = sbr.rel (%p274) target = $region44
      $region43: #{tpu_custom_call.1} parent=5 // pred_region
        // Predicated region
        $region45: #{tpu_custom_call.1} parent=43 // pred_check
          %p277 = pneg %p38
        $region46: #{tpu_custom_call.1} parent=43 // pred_check_branch
          %279 = sbr.rel (%p277) target = $region48
        $region47: #{tpu_custom_call.1} parent=43 // pred_region
          %s280 = sand.u32 %s28, 1
          %s281 = scalar_lea.sflag [#allocation3], %s280
          %s282 = sand.u32 %s28, 1
          %s283 = smul.addr %s282, 8
          %s284 = scalar_lea.vmem [#allocation2], %s283
          %s286 = ssub.s32 128, 128
          %287 = vsyncadd %s281, %s286
          %s288 = smul.addr %s18, 128
          %s289 = scalar_lea.hbm %s0, %s288
          %s291 = sshll.u32 %s284, 4
          %s292 = int_to_ptr.vmem [resolvable:$true] %s291
          %294 = dma.hbm_to_vmem [thread:$0]  %s289, 128, %s292, %s281
        $region48: #{tpu_custom_call.1} parent=43 // pred_fallthru
          _
      $region44: #{tpu_custom_call.1} parent=5 // pred_fallthru
        _
      %p295 = scmp.le.s32.totalorder 1, %s18
      %p296 = scmp.lt.s32.totalorder %s18, 3
      %p297 = pnand %p295, %p296
      %p298 = pneg %p297
      // Predicated region
      $region49: #{tpu_custom_call.1} parent=5 // pred_check
        _
      $region50: #{tpu_custom_call.1} parent=5 // pred_check_branch
        %300 = sbr.rel (%p297) target = $region52
      $region51: #{tpu_custom_call.1} parent=5 // pred_region
        %s301 = ssub.s32 %s18, 1
        %s302 = sand.u32 %s31, 1
        %s303 = scalar_lea.sflag [#allocation3], %s302
        %s304 = sand.u32 %s31, 1
        %s305 = smul.addr %s304, 8
        %s306 = scalar_lea.vmem [#allocation2], %s305
        // Predicated region
        $region53: #{tpu_custom_call.1} parent=51 // pred_check
          %p307 = pneg %p44
        $region54: #{tpu_custom_call.1} parent=51 // pred_check_branch
          %309 = sbr.rel (%p307) target = $region56
        $region55: #{tpu_custom_call.1} parent=51 // pred_region
          %310 = dma.done %s303, 128
        $region56: #{tpu_custom_call.1} parent=51 // pred_fallthru
          _
        // Predicated region
        $region57: #{tpu_custom_call.1} parent=51 // pred_check
          %p311 = pneg %p65
        $region58: #{tpu_custom_call.1} parent=51 // pred_check_branch
          %313 = sbr.rel (%p311) target = $region60
        $region59: #{tpu_custom_call.1} parent=51 // pred_region
          %314 = dma.done [#allocation5], 1536
        $region60: #{tpu_custom_call.1} parent=51 // pred_fallthru
          _
        // Predicated region
        $region61: #{tpu_custom_call.1} parent=51 // pred_check
          %p315 = pneg %p128
        $region62: #{tpu_custom_call.1} parent=51 // pred_check_branch
          %317 = sbr.rel (%p315) target = $region64
        $region63: #{tpu_custom_call.1} parent=51 // pred_region
          %318 = dma.done [#allocation5], 512
        $region64: #{tpu_custom_call.1} parent=51 // pred_fallthru
          _
        %s319 = sand.u32 %s31, 1
        %s320 = scalar_lea.sflag [#allocation3], %s319
        %s321 = sand.u32 %s31, 1
        %s322 = smul.addr %s321, 8
        %s323 = scalar_lea.vmem [#allocation2], %s322
        %p324 = pneg %p44
        %p325 = pneg %p41
        %p326 = pneg %p65
        %p327 = pneg %p62
        %p328 = pneg %p86
        %p329 = pneg %p83
        %p330 = pneg %p107
        %p331 = pneg %p104
        %p332 = pneg %p128
        %p333 = pneg %p125
        %p334 = pneg %p149
        %p335 = pneg %p146
        %p336 = pneg %p170
        %p337 = pneg %p167
        %p338 = pneg %p191
        %p339 = pneg %p188
        %p340 = pneg %p217
        %p341 = pneg %p214
        %p342 = scmp.lt.s32.totalorder %s23, 1
        %s343 = scalar_select %p342, %s23, 1
        %s344 = smul.addr %s343, 8
        %s345 = scalar_lea.vmem %s8, %s344
        %p346 = scmp.lt.s32.totalorder %s23, 1
        %s347 = scalar_select %p346, %s23, 1
        %s348 = smul.addr %s347, 8
        %s349 = scalar_lea.vmem %s8, %s348
        %v350 = vld [vmem:[%s306] sm:$0xff]
        %v351 = vmul.f32 %v350, 0.5
        %v352 = vtanh.pop %v351
        %v353 = vadd.f32 %v352, 1.0
        %v354 = vmul.f32 %v351, %v353
        %vm355 = vcmask 261120
        %v356 = vsel %vm355, %v354, 0.0
        %357 = vadd.xlane.f32.xlu0 %v356
        %v358 = vpop.xlane.xlu0 %357
        %v359 = vrcp.pop 32.0
        %v360 = vmul.f32 %v358, %v359
        %v361 = vmul.f32 %v354, %v354
        %v362 = vsel %vm355, %v361, 0.0
        %363 = vadd.xlane.f32.xlu0 %v362
        %v364 = vpop.xlane.xlu0 %363
        %v365 = vmul.f32 %v364, %v359
        %v366 = vmul.f32 %v360, %v360
        %v367 = vsub.f32 %v365, %v366
        %v368 = vmax.f32 %v367, 0.0
        %v369 = vadd.f32 %v368, 1e-05
        %v370 = vrsqrt.pop %v369
        %v371 = vld [vmem:[#allocation6] sm:$0xff]
        %v372 = vld [vmem:[#allocation6 + $0x8] sm:$0xff]
        %v373 = vld [vmem:[#allocation6 + $0x10] sm:$0xff]
        %v374 = vld [vmem:[#allocation6 + $0x18] sm:$0xff]
        %v376 = vsel %vm355, %v354, 0
        %378 = vmatprep.subr.mxu0 0.0
        %379 = vmatpush1.msra.mxu0 %v371
        %380 = vmatprep.subr.mxu0 0.0
        %381 = vmatpush1.msra.mxu0 %v372
        %382 = vmatprep.subr.mxu0 0.0
        %383 = vmatpush1.msra.mxu0 %v373
        %384 = vmatprep.subr.mxu0 0.0
        %385 = vmatpush1.msra.mxu0 %v374
        %386 = vmatprep.subr.mxu0 0.0
        %387 = vmatpush1.msra.mxu0 0.0
        %388 = vmatprep.subr.mxu0 0.0
        %389 = vmatpush1.msra.mxu0 0.0
        %390 = vmatprep.subr.mxu0 0.0
        %391 = vmatpush1.msra.mxu0 0.0
        %392 = vmatprep.subr.mxu0 0.0
        %393 = vmatpush1.msra.mxu0 0.0
        %394 = vmatprep.subr.mxu0 0.0
        %395 = vmatpush1.msra.mxu0 0.0
        %396 = vmatprep.subr.mxu0 0.0
        %397 = vmatpush1.msra.mxu0 0.0
        %398 = vmatprep.subr.mxu0 0.0
        %399 = vmatpush1.msra.mxu0 0.0
        %400 = vmatprep.subr.mxu0 0.0
        %401 = vmatpush1.msra.mxu0 0.0
        %402 = vmatprep.subr.mxu0 0.0
        %403 = vmatpush1.msra.mxu0 0.0
        %404 = vmatprep.subr.mxu0 0.0
        %405 = vmatpush1.msra.mxu0 0.0
        %406 = vmatprep.subr.mxu0 0.0
        %407 = vmatpush1.msra.mxu0 0.0
        %408 = vmatprep.subr.mxu0 0.0
        %409 = vmatpush1.msra.mxu0 0.0
        %410 = vmatprep.subr.mxu0 0.0
        %411 = vmatpush1.msra.mxu0 0.0
        %412 = vmatprep.subr.mxu0 0.0
        %413 = vmatpush1.msra.mxu0 0.0
        %414 = vmatprep.subr.mxu0 0.0
        %415 = vmatpush1.msra.mxu0 0.0
        %416 = vmatprep.subr.mxu0 0.0
        %417 = vmatpush1.msra.mxu0 0.0
        %418 = vmatprep.subr.mxu0 0.0
        %419 = vmatpush1.msra.mxu0 0.0
        %420 = vmatprep.subr.mxu0 0.0
        %421 = vmatpush1.msra.mxu0 0.0
        %422 = vmatprep.subr.mxu0 0.0
        %423 = vmatpush1.msra.mxu0 0.0
        %424 = vmatprep.subr.mxu0 0.0
        %425 = vmatpush1.msra.mxu0 0.0
        %426 = vmatprep.subr.mxu0 0.0
        %427 = vmatpush1.msra.mxu0 0.0
        %428 = vmatprep.subr.mxu0 0.0
        %429 = vmatpush1.msra.mxu0 0.0
        %430 = vmatprep.subr.mxu0 0.0
        %431 = vmatpush1.msra.mxu0 0.0
        %432 = vmatprep.subr.mxu0 0.0
        %433 = vmatpush1.msra.mxu0 0.0
        %434 = vmatprep.subr.mxu0 0.0
        %435 = vmatpush1.msra.mxu0 0.0
        %436 = vmatprep.subr.mxu0 0.0
        %437 = vmatpush1.msra.mxu0 0.0
        %438 = vmatprep.subr.mxu0 0.0
        %439 = vmatpush1.msra.mxu0 0.0
        %440 = vmatprep.subr.mxu0 0.0
        %441 = vmatpush1.msra.mxu0 0.0
        %442 = vmatprep.mubr.f32.mxu0 0.0
        %443 = vmatmul.mubr.f32.gmra.mrb[0].mxu0 %v376
        %v444 = vpop.f32.mrb[0].mxu0
        %v445 = vadd.f32 0.0, %v444
        %v446 = vpop.f32.mrb[0].mxu0
        %447 = vdwg.mxu0
        %v448 = vld [vmem:[#allocation4] sm:$0xff]
        %v449 = vld [vmem:[#allocation4 + $0x8] sm:$0xff]
        %v450 = vld [vmem:[#allocation4 + $0x10] sm:$0xff]
        %v451 = vld [vmem:[#allocation4 + $0x18] sm:$0xff]
        %v453 = vsel %vm355, %v350, 0
        %455 = vmatprep.subr.mxu0 0.0
        %456 = vmatpush1.msra.mxu0 %v448
        %457 = vmatprep.subr.mxu0 0.0
        %458 = vmatpush1.msra.mxu0 %v449
        %459 = vmatprep.subr.mxu0 0.0
        %460 = vmatpush1.msra.mxu0 %v450
        %461 = vmatprep.subr.mxu0 0.0
        %462 = vmatpush1.msra.mxu0 %v451
        %463 = vmatprep.subr.mxu0 0.0
        %464 = vmatpush1.msra.mxu0 0.0
        %465 = vmatprep.subr.mxu0 0.0
        %466 = vmatpush1.msra.mxu0 0.0
        %467 = vmatprep.subr.mxu0 0.0
        %468 = vmatpush1.msra.mxu0 0.0
        %469 = vmatprep.subr.mxu0 0.0
        %470 = vmatpush1.msra.mxu0 0.0
        %471 = vmatprep.subr.mxu0 0.0
        %472 = vmatpush1.msra.mxu0 0.0
        %473 = vmatprep.subr.mxu0 0.0
        %474 = vmatpush1.msra.mxu0 0.0
        %475 = vmatprep.subr.mxu0 0.0
        %476 = vmatpush1.msra.mxu0 0.0
        %477 = vmatprep.subr.mxu0 0.0
        %478 = vmatpush1.msra.mxu0 0.0
        %479 = vmatprep.subr.mxu0 0.0
        %480 = vmatpush1.msra.mxu0 0.0
        %481 = vmatprep.subr.mxu0 0.0
        %482 = vmatpush1.msra.mxu0 0.0
        %483 = vmatprep.subr.mxu0 0.0
        %484 = vmatpush1.msra.mxu0 0.0
        %485 = vmatprep.subr.mxu0 0.0
        %486 = vmatpush1.msra.mxu0 0.0
        %487 = vmatprep.subr.mxu0 0.0
        %488 = vmatpush1.msra.mxu0 0.0
        %489 = vmatprep.subr.mxu0 0.0
        %490 = vmatpush1.msra.mxu0 0.0
        %491 = vmatprep.subr.mxu0 0.0
        %492 = vmatpush1.msra.mxu0 0.0
        %493 = vmatprep.subr.mxu0 0.0
        %494 = vmatpush1.msra.mxu0 0.0
        %495 = vmatprep.subr.mxu0 0.0
        %496 = vmatpush1.msra.mxu0 0.0
        %497 = vmatprep.subr.mxu0 0.0
        %498 = vmatpush1.msra.mxu0 0.0
        %499 = vmatprep.subr.mxu0 0.0
        %500 = vmatpush1.msra.mxu0 0.0
        %501 = vmatprep.subr.mxu0 0.0
        %502 = vmatpush1.msra.mxu0 0.0
        %503 = vmatprep.subr.mxu0 0.0
        %504 = vmatpush1.msra.mxu0 0.0
        %505 = vmatprep.subr.mxu0 0.0
        %506 = vmatpush1.msra.mxu0 0.0
        %507 = vmatprep.subr.mxu0 0.0
        %508 = vmatpush1.msra.mxu0 0.0
        %509 = vmatprep.subr.mxu0 0.0
        %510 = vmatpush1.msra.mxu0 0.0
        %511 = vmatprep.subr.mxu0 0.0
        %512 = vmatpush1.msra.mxu0 0.0
        %513 = vmatprep.subr.mxu0 0.0
        %514 = vmatpush1.msra.mxu0 0.0
        %515 = vmatprep.subr.mxu0 0.0
        %516 = vmatpush1.msra.mxu0 0.0
        %517 = vmatprep.subr.mxu0 0.0
        %518 = vmatpush1.msra.mxu0 0.0
        %519 = vmatprep.mubr.f32.mxu0 0.0
        %520 = vmatmul.mubr.f32.gmra.mrb[0].mxu0 %v453
        %v521 = vpop.f32.mrb[0].mxu0
        %v522 = vadd.f32 0.0, %v521
        %v523 = vpop.f32.mrb[0].mxu0
        %524 = vdwg.mxu0
        %v525 = vmul.f32 %v522, 0.5
        %v526 = vtanh.pop %v525
        %v527 = vadd.f32 %v526, 1.0
        %v528 = vmul.f32 %v525, %v527
        %s529 = scalar_lea.vmem [#allocation4], 32
        %v530 = vld [vmem:[%s529] sm:$0xff]
        %v531 = vld [vmem:[%s529 + $0x8] sm:$0xff]
        %v532 = vld [vmem:[%s529 + $0x10] sm:$0xff]
        %v533 = vld [vmem:[%s529 + $0x18] sm:$0xff]
        %534 = vmatprep.subr.mxu0 0.0
        %535 = vmatpush1.msra.mxu0 %v530
        %536 = vmatprep.subr.mxu0 0.0
        %537 = vmatpush1.msra.mxu0 %v531
        %538 = vmatprep.subr.mxu0 0.0
        %539 = vmatpush1.msra.mxu0 %v532
        %540 = vmatprep.subr.mxu0 0.0
        %541 = vmatpush1.msra.mxu0 %v533
        %542 = vmatprep.subr.mxu0 0.0
        %543 = vmatpush1.msra.mxu0 0.0
        %544 = vmatprep.subr.mxu0 0.0
        %545 = vmatpush1.msra.mxu0 0.0
        %546 = vmatprep.subr.mxu0 0.0
        %547 = vmatpush1.msra.mxu0 0.0
        %548 = vmatprep.subr.mxu0 0.0
        %549 = vmatpush1.msra.mxu0 0.0
        %550 = vmatprep.subr.mxu0 0.0
        %551 = vmatpush1.msra.mxu0 0.0
        %552 = vmatprep.subr.mxu0 0.0
        %553 = vmatpush1.msra.mxu0 0.0
        %554 = vmatprep.subr.mxu0 0.0
        %555 = vmatpush1.msra.mxu0 0.0
        %556 = vmatprep.subr.mxu0 0.0
        %557 = vmatpush1.msra.mxu0 0.0
        %558 = vmatprep.subr.mxu0 0.0
        %559 = vmatpush1.msra.mxu0 0.0
        %560 = vmatprep.subr.mxu0 0.0
        %561 = vmatpush1.msra.mxu0 0.0
        %562 = vmatprep.subr.mxu0 0.0
        %563 = vmatpush1.msra.mxu0 0.0
        %564 = vmatprep.subr.mxu0 0.0
        %565 = vmatpush1.msra.mxu0 0.0
        %566 = vmatprep.subr.mxu0 0.0
        %567 = vmatpush1.msra.mxu0 0.0
        %568 = vmatprep.subr.mxu0 0.0
        %569 = vmatpush1.msra.mxu0 0.0
        %570 = vmatprep.subr.mxu0 0.0
        %571 = vmatpush1.msra.mxu0 0.0
        %572 = vmatprep.subr.mxu0 0.0
        %573 = vmatpush1.msra.mxu0 0.0
        %574 = vmatprep.subr.mxu0 0.0
        %575 = vmatpush1.msra.mxu0 0.0
        %576 = vmatprep.subr.mxu0 0.0
        %577 = vmatpush1.msra.mxu0 0.0
        %578 = vmatprep.subr.mxu0 0.0
        %579 = vmatpush1.msra.mxu0 0.0
        %580 = vmatprep.subr.mxu0 0.0
        %581 = vmatpush1.msra.mxu0 0.0
        %582 = vmatprep.subr.mxu0 0.0
        %583 = vmatpush1.msra.mxu0 0.0
        %584 = vmatprep.subr.mxu0 0.0
        %585 = vmatpush1.msra.mxu0 0.0
        %586 = vmatprep.subr.mxu0 0.0
        %587 = vmatpush1.msra.mxu0 0.0
        %588 = vmatprep.subr.mxu0 0.0
        %589 = vmatpush1.msra.mxu0 0.0
        %590 = vmatprep.subr.mxu0 0.0
        %591 = vmatpush1.msra.mxu0 0.0
        %592 = vmatprep.subr.mxu0 0.0
        %593 = vmatpush1.msra.mxu0 0.0
        %594 = vmatprep.subr.mxu0 0.0
        %595 = vmatpush1.msra.mxu0 0.0
        %596 = vmatprep.subr.mxu0 0.0
        %597 = vmatpush1.msra.mxu0 0.0
        %598 = vmatprep.mubr.f32.mxu0 0.0
        %599 = vmatmul.mubr.f32.gmra.mrb[0].mxu0 %v453
        %v600 = vpop.f32.mrb[0].mxu0
        %v601 = vadd.f32 0.0, %v600
        %v602 = vpop.f32.mrb[0].mxu0
        %603 = vdwg.mxu0
        %v604 = vmul.f32 %v601, 0.5
        %v605 = vtanh.pop %v604
        %v606 = vadd.f32 %v605, 1.0
        %v607 = vmul.f32 %v604, %v606
        %s608 = scalar_lea.vmem [#allocation4], 64
        %v609 = vld [vmem:[%s608] sm:$0xff]
        %v610 = vld [vmem:[%s608 + $0x8] sm:$0xff]
        %v611 = vld [vmem:[%s608 + $0x10] sm:$0xff]
        %v612 = vld [vmem:[%s608 + $0x18] sm:$0xff]
        %613 = vmatprep.subr.mxu0 0.0
        %614 = vmatpush1.msra.mxu0 %v609
        %615 = vmatprep.subr.mxu0 0.0
        %616 = vmatpush1.msra.mxu0 %v610
        %617 = vmatprep.subr.mxu0 0.0
        %618 = vmatpush1.msra.mxu0 %v611
        %619 = vmatprep.subr.mxu0 0.0
        %620 = vmatpush1.msra.mxu0 %v612
        %621 = vmatprep.subr.mxu0 0.0
        %622 = vmatpush1.msra.mxu0 0.0
        %623 = vmatprep.subr.mxu0 0.0
        %624 = vmatpush1.msra.mxu0 0.0
        %625 = vmatprep.subr.mxu0 0.0
        %626 = vmatpush1.msra.mxu0 0.0
        %627 = vmatprep.subr.mxu0 0.0
        %628 = vmatpush1.msra.mxu0 0.0
        %629 = vmatprep.subr.mxu0 0.0
        %630 = vmatpush1.msra.mxu0 0.0
        %631 = vmatprep.subr.mxu0 0.0
        %632 = vmatpush1.msra.mxu0 0.0
        %633 = vmatprep.subr.mxu0 0.0
        %634 = vmatpush1.msra.mxu0 0.0
        %635 = vmatprep.subr.mxu0 0.0
        %636 = vmatpush1.msra.mxu0 0.0
        %637 = vmatprep.subr.mxu0 0.0
        %638 = vmatpush1.msra.mxu0 0.0
        %639 = vmatprep.subr.mxu0 0.0
        %640 = vmatpush1.msra.mxu0 0.0
        %641 = vmatprep.subr.mxu0 0.0
        %642 = vmatpush1.msra.mxu0 0.0
        %643 = vmatprep.subr.mxu0 0.0
        %644 = vmatpush1.msra.mxu0 0.0
        %645 = vmatprep.subr.mxu0 0.0
        %646 = vmatpush1.msra.mxu0 0.0
        %647 = vmatprep.subr.mxu0 0.0
        %648 = vmatpush1.msra.mxu0 0.0
        %649 = vmatprep.subr.mxu0 0.0
        %650 = vmatpush1.msra.mxu0 0.0
        %651 = vmatprep.subr.mxu0 0.0
        %652 = vmatpush1.msra.mxu0 0.0
        %653 = vmatprep.subr.mxu0 0.0
        %654 = vmatpush1.msra.mxu0 0.0
        %655 = vmatprep.subr.mxu0 0.0
        %656 = vmatpush1.msra.mxu0 0.0
        %657 = vmatprep.subr.mxu0 0.0
        %658 = vmatpush1.msra.mxu0 0.0
        %659 = vmatprep.subr.mxu0 0.0
        %660 = vmatpush1.msra.mxu0 0.0
        %661 = vmatprep.subr.mxu0 0.0
        %662 = vmatpush1.msra.mxu0 0.0
        %663 = vmatprep.subr.mxu0 0.0
        %664 = vmatpush1.msra.mxu0 0.0
        %665 = vmatprep.subr.mxu0 0.0
        %666 = vmatpush1.msra.mxu0 0.0
        %667 = vmatprep.subr.mxu0 0.0
        %668 = vmatpush1.msra.mxu0 0.0
        %669 = vmatprep.subr.mxu0 0.0
        %670 = vmatpush1.msra.mxu0 0.0
        %671 = vmatprep.subr.mxu0 0.0
        %672 = vmatpush1.msra.mxu0 0.0
        %673 = vmatprep.subr.mxu0 0.0
        %674 = vmatpush1.msra.mxu0 0.0
        %675 = vmatprep.subr.mxu0 0.0
        %676 = vmatpush1.msra.mxu0 0.0
        %677 = vmatprep.mubr.f32.mxu0 0.0
        %678 = vmatmul.mubr.f32.gmra.mrb[0].mxu0 %v453
        %v679 = vpop.f32.mrb[0].mxu0
        %v680 = vadd.f32 0.0, %v679
        %v681 = vpop.f32.mrb[0].mxu0
        %682 = vdwg.mxu0
        %v683 = vmul.f32 %v680, 0.5
        %v684 = vtanh.pop %v683
        %v685 = vadd.f32 %v684, 1.0
        %v686 = vmul.f32 %v683, %v685
        %v687 = vsel %vm355, %v528, 0.0
        %688 = vadd.xlane.f32.xlu0 %v687
        %v689 = vpop.xlane.xlu0 %688
        %v690 = vsel %vm355, %v607, 0.0
        %691 = vadd.xlane.f32.xlu0 %v690
        %v692 = vpop.xlane.xlu0 %691
        %v693 = vadd.f32 %v689, %v692
        %v694 = vsel %vm355, %v686, 0.0
        %695 = vadd.xlane.f32.xlu0 %v694
        %v696 = vpop.xlane.xlu0 %695
        %v697 = vadd.f32 %v693, %v696
        %v698 = vmul.f32 %v528, %v528
        %v699 = vsel %vm355, %v698, 0.0
        %700 = vadd.xlane.f32.xlu0 %v699
        %v701 = vpop.xlane.xlu0 %700
        %v702 = vmul.f32 %v607, %v607
        %v703 = vsel %vm355, %v702, 0.0
        %704 = vadd.xlane.f32.xlu0 %v703
        %v705 = vpop.xlane.xlu0 %704
        %v706 = vadd.f32 %v701, %v705
        %v707 = vmul.f32 %v686, %v686
        %v708 = vsel %vm355, %v707, 0.0
        %709 = vadd.xlane.f32.xlu0 %v708
        %v710 = vpop.xlane.xlu0 %709
        %v711 = vadd.f32 %v706, %v710
        %v712 = vmul.f32 %v697, 0.010416667
        %v713 = vmul.f32 %v711, 0.010416667
        %v714 = vmul.f32 %v712, %v712
        %v715 = vsub.f32 %v713, %v714
        %v716 = vmax.f32 %v715, 0.0
        %v717 = vadd.f32 %v716, 1e-05
        %v718 = vrsqrt.pop %v717
        %v719 = vld [vmem:[%s7] sm:$0x1]
        %v720 = vld [vmem:[%s5] sm:$0x1]
        %v721 = vlaneseq
        %v722 = vshrl.u32 %v721, 7
        %v723 = vsub.s32 0, %v722
        %v724 = vrot.slane %v720, %v723
        %v725 = vmul.f32 %v360, %v724
        %v726 = vsub.f32 %v445, %v725
        %v727 = vmul.f32 %v370, %v726
        %v728 = vld [vmem:[%s5 + $0x1] sm:$0x1]
        %v729 = vlaneseq
        %v730 = vshrl.u32 %v729, 7
        %v731 = vsub.s32 0, %v730
        %v732 = vrot.slane %v728, %v731
        %v733 = vadd.f32 %v727, %v732
        %v734 = vsub.f32 %v528, %v712
        %v735 = vld [vmem:[%s2] sm:$0x1]
        %v736 = vlaneseq
        %v737 = vshrl.u32 %v736, 7
        %v738 = vsub.s32 0, %v737
        %v739 = vrot.slane %v735, %v738
        %v740 = vmul.f32 %v718, %v739
        %v741 = vmul.f32 %v734, %v740
        %v742 = vld [vmem:[%s3] sm:$0x1]
        %v743 = vlaneseq
        %v744 = vshrl.u32 %v743, 7
        %v745 = vsub.s32 0, %v744
        %v746 = vrot.slane %v742, %v745
        %v747 = vadd.f32 %v741, %v746
        %v748 = vmul.f32 %v747, 0.5
        %v749 = vtanh.pop %v748
        %v750 = vadd.f32 %v749, 1.0
        %v751 = vmul.f32 %v748, %v750
        %v752 = vsel %vm355, %v751, 0.0
        %753 = vadd.xlane.f32.xlu0 %v752
        %v754 = vpop.xlane.xlu0 %753
        %v755 = vmul.f32 %v754, %v359
        %v756 = vmul.f32 %v751, %v751
        %v757 = vsel %vm355, %v756, 0.0
        %758 = vadd.xlane.f32.xlu0 %v757
        %v759 = vpop.xlane.xlu0 %758
        %v760 = vmul.f32 %v759, %v359
        %v761 = vmul.f32 %v755, %v755
        %v762 = vsub.f32 %v760, %v761
        %v763 = vmax.f32 %v762, 0.0
        %v764 = vadd.f32 %v763, 1e-05
        %v765 = vrsqrt.pop %v764
        %v766 = vld [vmem:[%s6] sm:$0x1]
        %v768 = vlaneseq
        %v769 = vshrl.u32 %v768, 7
        %v770 = vsub.s32 0, %v769
        %v771 = vrot.slane %v766, %v770
        %v773 = vmul.f32 %v751, %v771
        %v774 = vsel %vm355, %v773, 0.0
        %775 = vadd.xlane.f32.xlu0 %v774
        %v776 = vpop.xlane.xlu0 %775
        %v778 = vlaneseq
        %v779 = vshrl.u32 %v778, 7
        %v780 = vsub.s32 0, %v779
        %v781 = vrot.slane %v719, %v780
        %v783 = vmul.f32 %v755, %v781
        %v784 = vsub.f32 %v776, %v783
        %v785 = vmul.f32 %v765, %v784
        %786 = vrot.lane.b32.xlu0 %v781, 127
        %v787 = vpop.permute.xlu0 %786
        %v789 = vadd.f32 %v785, %v787
        %v790 = vmul.f32 %v789, %v733
        %vm791 = vcmask 7168
        %792 = vst.msk [vmem:[%s349] sm:$0xff] %vm791, %v790
        %v793 = vld [vmem:[%s5] sm:$0x1]
        %v794 = vlaneseq
        %v795 = vshrl.u32 %v794, 7
        %v796 = vsub.s32 0, %v795
        %v797 = vrot.slane %v793, %v796
        %v798 = vmul.f32 %v360, %v797
        %v799 = vsub.f32 %v445, %v798
        %v800 = vmul.f32 %v370, %v799
        %v801 = vld [vmem:[%s5 + $0x1] sm:$0x1]
        %v802 = vlaneseq
        %v803 = vshrl.u32 %v802, 7
        %v804 = vsub.s32 0, %v803
        %v805 = vrot.slane %v801, %v804
        %v806 = vadd.f32 %v800, %v805
        %v807 = vsub.f32 %v607, %v712
        %v808 = vld [vmem:[%s2 + $0x1] sm:$0x1]
        %v809 = vlaneseq
        %v810 = vshrl.u32 %v809, 7
        %v811 = vsub.s32 0, %v810
        %v812 = vrot.slane %v808, %v811
        %v813 = vmul.f32 %v718, %v812
        %v814 = vmul.f32 %v807, %v813
        %v815 = vld [vmem:[%s3 + $0x1] sm:$0x1]
        %v816 = vlaneseq
        %v817 = vshrl.u32 %v816, 7
        %v818 = vsub.s32 0, %v817
        %v819 = vrot.slane %v815, %v818
        %v820 = vadd.f32 %v814, %v819
        %v821 = vmul.f32 %v820, 0.5
        %v822 = vtanh.pop %v821
        %v823 = vadd.f32 %v822, 1.0
        %v824 = vmul.f32 %v821, %v823
        %v825 = vsel %vm355, %v824, 0.0
        %826 = vadd.xlane.f32.xlu0 %v825
        %v827 = vpop.xlane.xlu0 %826
        %v828 = vmul.f32 %v827, %v359
        %v829 = vmul.f32 %v824, %v824
        %v830 = vsel %vm355, %v829, 0.0
        %831 = vadd.xlane.f32.xlu0 %v830
        %v832 = vpop.xlane.xlu0 %831
        %v833 = vmul.f32 %v832, %v359
        %v834 = vmul.f32 %v828, %v828
        %v835 = vsub.f32 %v833, %v834
        %v836 = vmax.f32 %v835, 0.0
        %v837 = vadd.f32 %v836, 1e-05
        %v838 = vrsqrt.pop %v837
        %v839 = vld [vmem:[%s6] sm:$0x1]
        %v841 = vlaneseq
        %v842 = vshrl.u32 %v841, 7
        %v843 = vsub.s32 0, %v842
        %v844 = vrot.slane %v839, %v843
        %v846 = vmul.f32 %v824, %v844
        %v847 = vsel %vm355, %v846, 0.0
        %848 = vadd.xlane.f32.xlu0 %v847
        %v849 = vpop.xlane.xlu0 %848
        %v850 = vmul.f32 %v828, %v781
        %v851 = vsub.f32 %v849, %v850
        %v852 = vmul.f32 %v838, %v851
        %v853 = vadd.f32 %v852, %v787
        %855 = vrot.lane.b32.xlu0 %v806, 127
        %v856 = vpop.permute.xlu0 %855
        %v858 = vmul.f32 %v853, %v856
        %860 = vrot.lane.b32.xlu0 %v858, 1
        %v861 = vpop.permute.xlu0 %860
        %vm863 = vcmask 15368
        %864 = vst.msk [vmem:[%s349] sm:$0xff] %vm863, %v861
        %v865 = vld [vmem:[%s5] sm:$0x1]
        %v866 = vlaneseq
        %v867 = vshrl.u32 %v866, 7
        %v868 = vsub.s32 0, %v867
        %v869 = vrot.slane %v865, %v868
        %v870 = vmul.f32 %v360, %v869
        %v871 = vsub.f32 %v445, %v870
        %v872 = vmul.f32 %v370, %v871
        %v873 = vld [vmem:[%s5 + $0x1] sm:$0x1]
        %v874 = vlaneseq
        %v875 = vshrl.u32 %v874, 7
        %v876 = vsub.s32 0, %v875
        %v877 = vrot.slane %v873, %v876
        %v878 = vadd.f32 %v872, %v877
        %v879 = vsub.f32 %v686, %v712
        %v880 = vld [vmem:[%s2 + $0x2] sm:$0x1]
        %v881 = vlaneseq
        %v882 = vshrl.u32 %v881, 7
        %v883 = vsub.s32 0, %v882
        %v884 = vrot.slane %v880, %v883
        %v885 = vmul.f32 %v718, %v884
        %v886 = vmul.f32 %v879, %v885
        %v887 = vld [vmem:[%s3 + $0x2] sm:$0x1]
        %v888 = vlaneseq
        %v889 = vshrl.u32 %v888, 7
        %v890 = vsub.s32 0, %v889
        %v891 = vrot.slane %v887, %v890
        %v892 = vadd.f32 %v886, %v891
        %v893 = vmul.f32 %v892, 0.5
        %v894 = vtanh.pop %v893
        %v895 = vadd.f32 %v894, 1.0
        %v896 = vmul.f32 %v893, %v895
        %v897 = vsel %vm355, %v896, 0.0
        %898 = vadd.xlane.f32.xlu0 %v897
        %v899 = vpop.xlane.xlu0 %898
        %v900 = vmul.f32 %v899, %v359
        %v901 = vmul.f32 %v896, %v896
        %v902 = vsel %vm355, %v901, 0.0
        %903 = vadd.xlane.f32.xlu0 %v902
        %v904 = vpop.xlane.xlu0 %903
        %v905 = vmul.f32 %v904, %v359
        %v906 = vmul.f32 %v900, %v900
        %v907 = vsub.f32 %v905, %v906
        %v908 = vmax.f32 %v907, 0.0
        %v909 = vadd.f32 %v908, 1e-05
        %v910 = vrsqrt.pop %v909
        %v911 = vld [vmem:[%s6] sm:$0x1]
        %v913 = vlaneseq
        %v914 = vshrl.u32 %v913, 7
        %v915 = vsub.s32 0, %v914
        %v916 = vrot.slane %v911, %v915
        %v918 = vmul.f32 %v896, %v916
        %v919 = vsel %vm355, %v918, 0.0
        %920 = vadd.xlane.f32.xlu0 %v919
        %v921 = vpop.xlane.xlu0 %920
        %v922 = vmul.f32 %v900, %v781
        %v923 = vsub.f32 %v921, %v922
        %v924 = vmul.f32 %v910, %v923
        %v925 = vadd.f32 %v924, %v787
        %927 = vrot.lane.b32.xlu0 %v878, 126
        %v928 = vpop.permute.xlu0 %927
        %v930 = vmul.f32 %v925, %v928
        %932 = vrot.lane.b32.xlu0 %v930, 2
        %v933 = vpop.permute.xlu0 %932
        %vm935 = vcmask 23568
        %936 = vst.msk [vmem:[%s349] sm:$0xff] %vm935, %v933
        %p937 = scmp.lt.s32.totalorder %s23, 1
        %s938 = scalar_select %p937, %s23, 1
        %s939 = smul.addr %s938, 8
        %s940 = scalar_lea.vmem %s8, %s939
        // Predicated region
        $region65: #{tpu_custom_call.1} parent=51 // pred_check
          %p941 = pneg %p214
        $region66: #{tpu_custom_call.1} parent=51 // pred_check_branch
          %943 = sbr.rel (%p941) target = $region68
        $region67: #{tpu_custom_call.1} parent=51 // pred_region
          _
        $region68: #{tpu_custom_call.1} parent=51 // pred_fallthru
          _
      $region52: #{tpu_custom_call.1} parent=5 // pred_fallthru
        _
      %p944 = scmp.le.s32.totalorder 2, %s18
      // Predicated region
      $region69: #{tpu_custom_call.1} parent=5 // pred_check
        %p945 = pneg %p944
      $region70: #{tpu_custom_call.1} parent=5 // pred_check_branch
        %947 = sbr.rel (%p945) target = $region72
      $region71: #{tpu_custom_call.1} parent=5 // pred_region
        %s948 = ssub.s32 %s18, 2
        // Predicated region
        $region73: #{tpu_custom_call.1} parent=71 // pred_check
          %p949 = pneg %p220
        $region74: #{tpu_custom_call.1} parent=71 // pred_check_branch
          %951 = sbr.rel (%p949) target = $region76
        $region75: #{tpu_custom_call.1} parent=71 // pred_region
          %p952 = scmp.lt.s32.totalorder %s24, 1
          %s953 = scalar_select %p952, %s24, 1
          %s954 = smul.addr %s953, 8
          %s955 = scalar_lea.vmem %s8, %s954
        $region76: #{tpu_custom_call.1} parent=71 // pred_fallthru
          _
      $region72: #{tpu_custom_call.1} parent=5 // pred_fallthru
        _
    $region6: #{tpu_custom_call.1} parent=1 // loop_footer
      %s22 = sadd.s32 1, %s18
    $region7: #{tpu_custom_call.1} parent=1 // loop_footer_branch
      %17 = sbr.rel target = $region3
    $region8: #{tpu_custom_call.1} parent=1 // loop_exit
      _
    %956 = vsyncpa [#allocation3], 1
    %s957 = scalar_lea.sflag [#allocation3], 1
    %958 = vsyncpa %s957, 1
    %959 = vsyncpa [#allocation5], 1

</llo_original>
